<compile_context>
chip_gen: v7x
topology: tpu7x:2x2x1
jax: 0.10.0
libtpu: 0.0.40
codegen_flags: <defaults>
</compile_context>

<pallas_src>
import functools

import jax
import jax.numpy as jnp
from jax.experimental import pallas as pl
from jax.experimental.pallas import tpu as pltpu


# ----------------------------------------------------------------------------
# Config (toy stand-in for xlnet-base-cased: 768 -> 32, 12 layers -> 2, ...)
# ----------------------------------------------------------------------------
VOCAB = 100
HIDDEN = 32          # stands in for XLNet's 768
N_LAYERS = 2
N_HEADS = 2
HEAD_DIM = HIDDEN // N_HEADS
FFN = 64
NUM_LABELS = 7       # len(label_cols)
CLS_PAD = 128        # lane-dense classifier output width (sliced to 7 outside)


# ----------------------------------------------------------------------------
# Fused Pallas kernel: all layers + mean-pool + classifier
# ----------------------------------------------------------------------------

def _layernorm(x, gamma, beta):
    mu = jnp.mean(x, axis=-1, keepdims=True)
    var = jnp.mean((x - mu) ** 2, axis=-1, keepdims=True)
    xn = (x - mu) * jax.lax.rsqrt(var + 1e-12)   # XLNet layer_norm eps = 1e-12
    return xn * gamma + beta


def _fused_model_kernel(
    emb_ref, mask_ref,
    wqkv_ref, bqkv_ref, wo_ref, bo_ref, ln1g_ref, ln1b_ref,
    w1_ref, b1_ref, w2_ref, b2_ref, ln2g_ref, ln2b_ref,
    clsw_ref, clsb_ref,
    out_ref,
    x_scr,
    *, B, S, H, NH, DH,
):
    layer = pl.program_id(0)

    # Load the embeddings into the resident activation buffer on step 0.
    @pl.when(layer == 0)
    def _():
        x_scr[...] = emb_ref[...].astype(jnp.float32)

    x = x_scr[...]                                              # (B*S, H) f32

    # ---- self-attention: fused QKV projection --------------------------------
    qkv = jnp.dot(x, wqkv_ref[...], preferred_element_type=jnp.float32)
    qkv = qkv + bqkv_ref[...]                                   # (B*S, 3H)

    mask_bias = mask_ref[...].reshape(B, 1, S)                  # 0 / -1e9 additive
    scale = 1.0 / (DH ** 0.5)

    # Per-head attention; output projection accumulated per head so no
    # transpose / concatenate is needed.
    attn_out = None
    for h in range(NH):
        q_h = qkv[:, 0 * H + h * DH: 0 * H + (h + 1) * DH].reshape(B, S, DH)
        k_h = qkv[:, 1 * H + h * DH: 1 * H + (h + 1) * DH].reshape(B, S, DH)
        v_h = qkv[:, 2 * H + h * DH: 2 * H + (h + 1) * DH].reshape(B, S, DH)

        s = jnp.einsum("bqd,bkd->bqk", q_h, k_h,
                       preferred_element_type=jnp.float32) * scale
        s = s + mask_bias
        s = s - jnp.max(s, axis=-1, keepdims=True)
        p = jnp.exp(s)
        p = p * pl.reciprocal(jnp.sum(p, axis=-1, keepdims=True), approx=True)

        ctx_h = jnp.einsum("bqk,bkd->bqd", p, v_h,
                           preferred_element_type=jnp.float32)  # (B, S, DH)
        ctx_h = ctx_h.reshape(B * S, DH)

        term = jnp.dot(ctx_h, wo_ref[h * DH:(h + 1) * DH, :],
                       preferred_element_type=jnp.float32)      # (B*S, H)
        attn_out = term if attn_out is None else attn_out + term

    attn_out = attn_out + bo_ref[...]
    h1 = _layernorm(attn_out + x, ln1g_ref[...], ln1b_ref[...])  # post-LN

    # ---- feed-forward ---------------------------------------------------------
    ff = jnp.dot(h1, w1_ref[...], preferred_element_type=jnp.float32) + b1_ref[...]
    ff = jax.nn.gelu(ff)
    ff = jnp.dot(ff, w2_ref[...], preferred_element_type=jnp.float32) + b2_ref[...]
    h2 = _layernorm(ff + h1, ln2g_ref[...], ln2b_ref[...])

    x_scr[...] = h2                                             # stays in VMEM

    # ---- mean-pool over sequence + classifier on the last layer --------------
    @pl.when(layer == pl.num_programs(0) - 1)
    def _():
        pooled = jnp.mean(h2.reshape(B, S, H), axis=1)          # (B, H)
        logits = jnp.dot(pooled, clsw_ref[...],
                         preferred_element_type=jnp.float32) + clsb_ref[...]
        out_ref[...] = logits.astype(out_ref.dtype)             # (B, CLS_PAD)


# ----------------------------------------------------------------------------
# Parameters
# ----------------------------------------------------------------------------

def init_params(key):
    keys = jax.random.split(key, 6)
    k_emb, k_qkv, k_o, k_1, k_2, k_cls = keys

    def dense(k, shape, std=0.02):
        return jax.random.normal(k, shape, jnp.float32) * std

    L, H, F, C = N_LAYERS, HIDDEN, FFN, NUM_LABELS
    params = {
        "word_emb": dense(k_emb, (VOCAB, H)),
        # Per-layer weights stacked along a leading layer dim; QKV fused.
        "wqkv": dense(k_qkv, (L, H, 3 * H)),
        "bqkv": jnp.zeros((L, 1, 3 * H), jnp.float32),
        "wo": dense(k_o, (L, H, H)),
        "bo": jnp.zeros((L, 1, H), jnp.float32),
        "ln1_g": jnp.ones((L, 1, H), jnp.float32),
        "ln1_b": jnp.zeros((L, 1, H), jnp.float32),
        "w1": dense(k_1, (L, H, F)),
        "b1": jnp.zeros((L, 1, F), jnp.float32),
        "w2": dense(k_2, (L, F, H)),
        "b2": jnp.zeros((L, 1, H), jnp.float32),
        "ln2_g": jnp.ones((L, 1, H), jnp.float32),
        "ln2_b": jnp.zeros((L, 1, H), jnp.float32),
    }

    # classifier: torch.nn.Linear(768, num_labels) with xavier_normal_ weights,
    # zero-padded to a lane-dense 128-wide output (cols >= C are exactly zero).
    xavier_std = (2.0 / (H + C)) ** 0.5
    cls_w = jax.random.normal(k_cls, (H, C), jnp.float32) * xavier_std
    params["cls_w_pad"] = jnp.zeros((H, CLS_PAD), jnp.float32).at[:, :C].set(cls_w)
    params["cls_b_pad"] = jnp.zeros((1, CLS_PAD), jnp.float32)
    return params


# ----------------------------------------------------------------------------
# Forward
# ----------------------------------------------------------------------------

def xlnet_multilabel_forward(params, input_ids, attention_mask):
    """Returns logits (B, NUM_LABELS) — matches the module's `labels is None` path."""
    B, S = input_ids.shape
    H, NH, DH = HIDDEN, N_HEADS, HEAD_DIM

    # Embedding gather (glue — no clean Pallas gather needed at this size).
    emb = jnp.take(params["word_emb"], input_ids, axis=0).reshape(B * S, H)

    # Additive attention-mask bias: 0 where attend, -1e9 at padding.
    mask_bias = (attention_mask.astype(jnp.float32) - 1.0) * 1e9      # (B, S)

    kernel = functools.partial(_fused_model_kernel, B=B, S=S, H=H, NH=NH, DH=DH)

    def full_spec(shape):
        n = len(shape)
        return pl.BlockSpec(shape, lambda l, _n=n: (0,) * _n)

    def per_layer_spec(shape):
        n = len(shape)
        return pl.BlockSpec((None,) + shape, lambda l, _n=n: (l,) + (0,) * _n)

    logits_padded = pl.pallas_call(
        kernel,
        out_shape=jax.ShapeDtypeStruct((B, CLS_PAD), jnp.float32),
        grid=(N_LAYERS,),
        in_specs=[
            full_spec((B * S, H)),          # embeddings
            full_spec((B, S)),              # mask bias
            per_layer_spec((H, 3 * H)),     # wqkv
            per_layer_spec((1, 3 * H)),     # bqkv
            per_layer_spec((H, H)),         # wo
            per_layer_spec((1, H)),         # bo
            per_layer_spec((1, H)),         # ln1_g
            per_layer_spec((1, H)),         # ln1_b
            per_layer_spec((H, FFN)),       # w1
            per_layer_spec((1, FFN)),       # b1
            per_layer_spec((FFN, H)),       # w2
            per_layer_spec((1, H)),         # b2
            per_layer_spec((1, H)),         # ln2_g
            per_layer_spec((1, H)),         # ln2_b
            full_spec((H, CLS_PAD)),        # classifier weight (padded)
            full_spec((1, CLS_PAD)),        # classifier bias (padded)
        ],
        out_specs=pl.BlockSpec((B, CLS_PAD), lambda l: (0, 0)),
        scratch_shapes=[pltpu.VMEM((B * S, H), jnp.float32)],   # resident activations
        compiler_params=pltpu.CompilerParams(
            dimension_semantics=("arbitrary",)),                # sequential layer loop
    )(
        emb, mask_bias,
        params["wqkv"], params["bqkv"], params["wo"], params["bo"],
        params["ln1_g"], params["ln1_b"],
        params["w1"], params["b1"], params["w2"], params["b2"],
        params["ln2_g"], params["ln2_b"],
        params["cls_w_pad"], params["cls_b_pad"],
    )

    return logits_padded[:, :NUM_LABELS]


# ----------------------------------------------------------------------------
# Main
# ----------------------------------------------------------------------------

if __name__ == "__main__":
    key = jax.random.PRNGKey(0)
    pkey, dkey = jax.random.split(key)

    params = init_params(pkey)

    B, S = 2, 8
    input_ids = jax.random.randint(dkey, (B, S), 0, VOCAB, dtype=jnp.int32)
    attention_mask = jnp.ones((B, S), dtype=jnp.int32)

    logits = jax.jit(xlnet_multilabel_forward)(params, input_ids, attention_mask)
    jax.block_until_ready(logits)

    assert logits.shape == (B, NUM_LABELS), logits.shape
    assert bool(jnp.all(jnp.isfinite(logits)))
    print("KERNEL_OK")
</pallas_src>

<mosaic_0001>
module attributes {stable_mosaic.version = 11 : i64} {
  func.func @_fused_model_kernel(%arg0: i32, %arg1: memref<16x32xf32, #tpu.memory_space<vmem>>, %arg2: memref<2x8xf32, #tpu.memory_space<vmem>>, %arg3: memref<1x32x96xf32, #tpu.memory_space<vmem>>, %arg4: memref<1x1x96xf32, #tpu.memory_space<vmem>>, %arg5: memref<1x32x32xf32, #tpu.memory_space<vmem>>, %arg6: memref<1x1x32xf32, #tpu.memory_space<vmem>>, %arg7: memref<1x1x32xf32, #tpu.memory_space<vmem>>, %arg8: memref<1x1x32xf32, #tpu.memory_space<vmem>>, %arg9: memref<1x32x64xf32, #tpu.memory_space<vmem>>, %arg10: memref<1x1x64xf32, #tpu.memory_space<vmem>>, %arg11: memref<1x64x32xf32, #tpu.memory_space<vmem>>, %arg12: memref<1x1x32xf32, #tpu.memory_space<vmem>>, %arg13: memref<1x1x32xf32, #tpu.memory_space<vmem>>, %arg14: memref<1x1x32xf32, #tpu.memory_space<vmem>>, %arg15: memref<32x128xf32, #tpu.memory_space<vmem>>, %arg16: memref<1x128xf32, #tpu.memory_space<vmem>>, %arg17: memref<2x128xf32, #tpu.memory_space<vmem>>, %arg18: memref<16x32xf32, #tpu.memory_space<vmem>>) attributes {dimension_semantics = [#tpu.dimension_semantics<arbitrary>], iteration_bounds = array<i64: 2>, scalar_prefetch = 0 : i64, scratch_operands = 1 : i64, tpu.core_type = #tpu.core_type<tc>, window_params = [{pipeline_mode = #tpu.pipeline_mode<synchronous>, transform_indices = @transform_0, window_bounds = array<i64: 16, 32>}, {pipeline_mode = #tpu.pipeline_mode<synchronous>, transform_indices = @transform_1, window_bounds = array<i64: 2, 8>}, {transform_indices = @transform_2, window_bounds = array<i64: 1, 32, 96>}, {transform_indices = @transform_3, window_bounds = array<i64: 1, 1, 96>}, {transform_indices = @transform_4, window_bounds = array<i64: 1, 32, 32>}, {transform_indices = @transform_5, window_bounds = array<i64: 1, 1, 32>}, {transform_indices = @transform_6, window_bounds = array<i64: 1, 1, 32>}, {transform_indices = @transform_7, window_bounds = array<i64: 1, 1, 32>}, {transform_indices = @transform_8, window_bounds = array<i64: 1, 32, 64>}, {transform_indices = @transform_9, window_bounds = array<i64: 1, 1, 64>}, {transform_indices = @transform_10, window_bounds = array<i64: 1, 64, 32>}, {transform_indices = @transform_11, window_bounds = array<i64: 1, 1, 32>}, {transform_indices = @transform_12, window_bounds = array<i64: 1, 1, 32>}, {transform_indices = @transform_13, window_bounds = array<i64: 1, 1, 32>}, {pipeline_mode = #tpu.pipeline_mode<synchronous>, transform_indices = @transform_14, window_bounds = array<i64: 32, 128>}, {pipeline_mode = #tpu.pipeline_mode<synchronous>, transform_indices = @transform_15, window_bounds = array<i64: 1, 128>}, {pipeline_mode = #tpu.pipeline_mode<synchronous>, transform_indices = @transform_16, window_bounds = array<i64: 2, 128>}]} {
    %c0_i32 = arith.constant 0 : i32
    %0 = arith.cmpi eq, %arg0, %c0_i32 : i32
    %1 = arith.extui %0 : i1 to i32
    %c0_i32_0 = arith.constant 0 : i32
    %2 = arith.cmpi ne, %1, %c0_i32_0 : i32
    scf.if %2 {
      %c0_73 = arith.constant 0 : index
      %c0_74 = arith.constant 0 : index
      %155 = vector.load %arg1[%c0_73, %c0_74] : memref<16x32xf32, #tpu.memory_space<vmem>>, vector<16x32xf32>
      %c0_75 = arith.constant 0 : index
      %c0_76 = arith.constant 0 : index
      %156 = vector.load %arg18[%c0_75, %c0_76] : memref<16x32xf32, #tpu.memory_space<vmem>>, vector<16x32xf32>
      tpu.vector_store %arg18[%c0_75, %c0_76], %155 {strides = array<i32>} : memref<16x32xf32, #tpu.memory_space<vmem>>, vector<16x32xf32>,
    } else {
    }
    %c0 = arith.constant 0 : index
    %c0_1 = arith.constant 0 : index
    %3 = vector.load %arg18[%c0, %c0_1] : memref<16x32xf32, #tpu.memory_space<vmem>>, vector<16x32xf32>
    %c0_2 = arith.constant 0 : index
    %c0_3 = arith.constant 0 : index
    %c0_4 = arith.constant 0 : index
    %4 = vector.load %arg3[%c0_2, %c0_3, %c0_4] : memref<1x32x96xf32, #tpu.memory_space<vmem>>, vector<1x32x96xf32>
    %5 = vector.shape_cast %4 : vector<1x32x96xf32> to vector<32x96xf32>
    %cst = arith.constant dense<0.000000e+00> : vector<16x96xf32>
    %6 = tpu.matmul %3, %5, %cst {dimension_numbers = #tpu.dot_dimension_numbers<[1], [0], [0], [1], [0, 0, 1, 1], [], []>} : vector<16x32xf32>, vector<32x96xf32>, vector<16x96xf32> -> vector<16x96xf32>
    %c0_5 = arith.constant 0 : index
    %c0_6 = arith.constant 0 : index
    %c0_7 = arith.constant 0 : index
    %7 = vector.load %arg4[%c0_5, %c0_6, %c0_7] : memref<1x1x96xf32, #tpu.memory_space<vmem>>, vector<1x1x96xf32>
    %8 = vector.shape_cast %7 : vector<1x1x96xf32> to vector<1x96xf32>
    %9 = vector.broadcast %8 : vector<1x96xf32> to vector<16x96xf32>
    %10 = arith.addf %6, %9 : vector<16x96xf32>
    %c0_8 = arith.constant 0 : index
    %c0_9 = arith.constant 0 : index
    %11 = vector.load %arg2[%c0_8, %c0_9] : memref<2x8xf32, #tpu.memory_space<vmem>>, vector<2x8xf32>
    %12 = vector.shape_cast %11 : vector<2x8xf32> to vector<2x1x8xf32>
    %13 = vector.extract_strided_slice %10 {offsets = [0, 0], sizes = [16, 16], strides = [1, 1]} : vector<16x96xf32> to vector<16x16xf32>
    %14 = vector.shape_cast %13 : vector<16x16xf32> to vector<2x8x16xf32>
    %15 = vector.extract_strided_slice %10 {offsets = [0, 32], sizes = [16, 16], strides = [1, 1]} : vector<16x96xf32> to vector<16x16xf32>
    %16 = vector.shape_cast %15 : vector<16x16xf32> to vector<2x8x16xf32>
    %17 = vector.extract_strided_slice %10 {offsets = [0, 64], sizes = [16, 16], strides = [1, 1]} : vector<16x96xf32> to vector<16x16xf32>
    %18 = vector.shape_cast %17 : vector<16x16xf32> to vector<2x8x16xf32>
    "tpu.trace_start"() <{level = 10 : i32, message = "bqd,bkd->bqk"}> : () -> ()
    %cst_10 = arith.constant dense<0.000000e+00> : vector<2x8x8xf32>
    %19 = tpu.matmul %14, %16, %cst_10 {dimension_numbers = #tpu.dot_dimension_numbers<[2], [2], [1], [1], [0, 0, 0, 1, 1, 1], [0], [0]>} : vector<2x8x16xf32>, vector<2x8x16xf32>, vector<2x8x8xf32> -> vector<2x8x8xf32>
    "tpu.trace_stop"() : () -> ()
    %cst_11 = arith.constant 2.500000e-01 : f32
    %20 = vector.broadcast %cst_11 : f32 to vector<2x8x8xf32>
    %21 = arith.mulf %19, %20 : vector<2x8x8xf32>
    %22 = vector.broadcast %12 : vector<2x1x8xf32> to vector<2x8x8xf32>
    %23 = arith.addf %21, %22 : vector<2x8x8xf32>
    %cst_12 = arith.constant dense<0xFF800000> : vector<2x8xf32>
    %24 = vector.multi_reduction <maximumf>, %23, %cst_12 [2] : vector<2x8x8xf32> to vector<2x8xf32>
    %25 = vector.shape_cast %24 : vector<2x8xf32> to vector<2x8x1xf32>
    %26 = vector.broadcast %25 : vector<2x8x1xf32> to vector<2x8x8xf32>
    %27 = arith.subf %23, %26 : vector<2x8x8xf32>
    %28 = math.exp %27 : vector<2x8x8xf32>
    %cst_13 = arith.constant dense<0.000000e+00> : vector<2x8xf32>
    %29 = vector.multi_reduction <add>, %28, %cst_13 [2] : vector<2x8x8xf32> to vector<2x8xf32>
    %30 = vector.shape_cast %29 : vector<2x8xf32> to vector<2x8x1xf32>
    %31 = tpu.reciprocal %30 {approx = true} : vector<2x8x1xf32> -> vector<2x8x1xf32>
    %32 = vector.broadcast %31 : vector<2x8x1xf32> to vector<2x8x8xf32>
    %33 = arith.mulf %28, %32 : vector<2x8x8xf32>
    "tpu.trace_start"() <{level = 10 : i32, message = "bqk,bkd->bqd"}> : () -> ()
    %cst_14 = arith.constant dense<0.000000e+00> : vector<2x8x16xf32>
    %34 = tpu.matmul %33, %18, %cst_14 {dimension_numbers = #tpu.dot_dimension_numbers<[2], [1], [1], [2], [0, 0, 0, 1, 1, 2], [0], [0]>} : vector<2x8x8xf32>, vector<2x8x16xf32>, vector<2x8x16xf32> -> vector<2x8x16xf32>
    "tpu.trace_stop"() : () -> ()
    %35 = vector.shape_cast %34 : vector<2x8x16xf32> to vector<16x16xf32>
    %c0_15 = arith.constant 0 : index
    %c0_16 = arith.constant 0 : index
    %c0_17 = arith.constant 0 : index
    %36 = vector.load %arg5[%c0_15, %c0_16, %c0_17] : memref<1x32x32xf32, #tpu.memory_space<vmem>>, vector<1x16x32xf32>
    %37 = vector.shape_cast %36 : vector<1x16x32xf32> to vector<16x32xf32>
    %cst_18 = arith.constant dense<0.000000e+00> : vector<16x32xf32>
    %38 = tpu.matmul %35, %37, %cst_18 {dimension_numbers = #tpu.dot_dimension_numbers<[1], [0], [0], [1], [0, 0, 1, 1], [], []>} : vector<16x16xf32>, vector<16x32xf32>, vector<16x32xf32> -> vector<16x32xf32>
    %39 = vector.extract_strided_slice %10 {offsets = [0, 16], sizes = [16, 16], strides = [1, 1]} : vector<16x96xf32> to vector<16x16xf32>
    %40 = vector.shape_cast %39 : vector<16x16xf32> to vector<2x8x16xf32>
    %41 = vector.extract_strided_slice %10 {offsets = [0, 48], sizes = [16, 16], strides = [1, 1]} : vector<16x96xf32> to vector<16x16xf32>
    %42 = vector.shape_cast %41 : vector<16x16xf32> to vector<2x8x16xf32>
    %43 = vector.extract_strided_slice %10 {offsets = [0, 80], sizes = [16, 16], strides = [1, 1]} : vector<16x96xf32> to vector<16x16xf32>
    %44 = vector.shape_cast %43 : vector<16x16xf32> to vector<2x8x16xf32>
    "tpu.trace_start"() <{level = 10 : i32, message = "bqd,bkd->bqk"}> : () -> ()
    %cst_19 = arith.constant dense<0.000000e+00> : vector<2x8x8xf32>
    %45 = tpu.matmul %40, %42, %cst_19 {dimension_numbers = #tpu.dot_dimension_numbers<[2], [2], [1], [1], [0, 0, 0, 1, 1, 1], [0], [0]>} : vector<2x8x16xf32>, vector<2x8x16xf32>, vector<2x8x8xf32> -> vector<2x8x8xf32>
    "tpu.trace_stop"() : () -> ()
    %cst_20 = arith.constant 2.500000e-01 : f32
    %46 = vector.broadcast %cst_20 : f32 to vector<2x8x8xf32>
    %47 = arith.mulf %45, %46 : vector<2x8x8xf32>
    %48 = vector.broadcast %12 : vector<2x1x8xf32> to vector<2x8x8xf32>
    %49 = arith.addf %47, %48 : vector<2x8x8xf32>
    %cst_21 = arith.constant dense<0xFF800000> : vector<2x8xf32>
    %50 = vector.multi_reduction <maximumf>, %49, %cst_21 [2] : vector<2x8x8xf32> to vector<2x8xf32>
    %51 = vector.shape_cast %50 : vector<2x8xf32> to vector<2x8x1xf32>
    %52 = vector.broadcast %51 : vector<2x8x1xf32> to vector<2x8x8xf32>
    %53 = arith.subf %49, %52 : vector<2x8x8xf32>
    %54 = math.exp %53 : vector<2x8x8xf32>
    %cst_22 = arith.constant dense<0.000000e+00> : vector<2x8xf32>
    %55 = vector.multi_reduction <add>, %54, %cst_22 [2] : vector<2x8x8xf32> to vector<2x8xf32>
    %56 = vector.shape_cast %55 : vector<2x8xf32> to vector<2x8x1xf32>
    %57 = tpu.reciprocal %56 {approx = true} : vector<2x8x1xf32> -> vector<2x8x1xf32>
    %58 = vector.broadcast %57 : vector<2x8x1xf32> to vector<2x8x8xf32>
    %59 = arith.mulf %54, %58 : vector<2x8x8xf32>
    "tpu.trace_start"() <{level = 10 : i32, message = "bqk,bkd->bqd"}> : () -> ()
    %cst_23 = arith.constant dense<0.000000e+00> : vector<2x8x16xf32>
    %60 = tpu.matmul %59, %44, %cst_23 {dimension_numbers = #tpu.dot_dimension_numbers<[2], [1], [1], [2], [0, 0, 0, 1, 1, 2], [0], [0]>} : vector<2x8x8xf32>, vector<2x8x16xf32>, vector<2x8x16xf32> -> vector<2x8x16xf32>
    "tpu.trace_stop"() : () -> ()
    %61 = vector.shape_cast %60 : vector<2x8x16xf32> to vector<16x16xf32>
    %c0_24 = arith.constant 0 : index
    %c16 = arith.constant 16 : index
    %c0_25 = arith.constant 0 : index
    %62 = vector.load %arg5[%c0_24, %c16, %c0_25] : memref<1x32x32xf32, #tpu.memory_space<vmem>>, vector<1x16x32xf32>
    %63 = vector.shape_cast %62 : vector<1x16x32xf32> to vector<16x32xf32>
    %cst_26 = arith.constant dense<0.000000e+00> : vector<16x32xf32>
    %64 = tpu.matmul %61, %63, %cst_26 {dimension_numbers = #tpu.dot_dimension_numbers<[1], [0], [0], [1], [0, 0, 1, 1], [], []>} : vector<16x16xf32>, vector<16x32xf32>, vector<16x32xf32> -> vector<16x32xf32>
    %65 = arith.addf %38, %64 : vector<16x32xf32>
    %c0_27 = arith.constant 0 : index
    %c0_28 = arith.constant 0 : index
    %c0_29 = arith.constant 0 : index
    %66 = vector.load %arg6[%c0_27, %c0_28, %c0_29] : memref<1x1x32xf32, #tpu.memory_space<vmem>>, vector<1x1x32xf32>
    %67 = vector.shape_cast %66 : vector<1x1x32xf32> to vector<1x32xf32>
    %68 = vector.broadcast %67 : vector<1x32xf32> to vector<16x32xf32>
    %69 = arith.addf %65, %68 : vector<16x32xf32>
    %70 = arith.addf %69, %3 : vector<16x32xf32>
    %c0_30 = arith.constant 0 : index
    %c0_31 = arith.constant 0 : index
    %c0_32 = arith.constant 0 : index
    %71 = vector.load %arg7[%c0_30, %c0_31, %c0_32] : memref<1x1x32xf32, #tpu.memory_space<vmem>>, vector<1x1x32xf32>
    %72 = vector.shape_cast %71 : vector<1x1x32xf32> to vector<1x32xf32>
    %c0_33 = arith.constant 0 : index
    %c0_34 = arith.constant 0 : index
    %c0_35 = arith.constant 0 : index
    %73 = vector.load %arg8[%c0_33, %c0_34, %c0_35] : memref<1x1x32xf32, #tpu.memory_space<vmem>>, vector<1x1x32xf32>
    %74 = vector.shape_cast %73 : vector<1x1x32xf32> to vector<1x32xf32>
    %cst_36 = arith.constant dense<0.000000e+00> : vector<16xf32>
    %75 = vector.multi_reduction <add>, %70, %cst_36 [1] : vector<16x32xf32> to vector<16xf32>
    %76 = vector.shape_cast %75 : vector<16xf32> to vector<16x1xf32>
    %cst_37 = arith.constant 3.200000e+01 : f32
    %77 = vector.broadcast %cst_37 : f32 to vector<16x1xf32>
    %78 = arith.divf %76, %77 : vector<16x1xf32>
    %79 = vector.broadcast %78 : vector<16x1xf32> to vector<16x32xf32>
    %80 = arith.subf %70, %79 : vector<16x32xf32>
    %81 = arith.mulf %80, %80 : vector<16x32xf32>
    %cst_38 = arith.constant dense<0.000000e+00> : vector<16xf32>
    %82 = vector.multi_reduction <add>, %81, %cst_38 [1] : vector<16x32xf32> to vector<16xf32>
    %83 = vector.shape_cast %82 : vector<16xf32> to vector<16x1xf32>
    %cst_39 = arith.constant 3.200000e+01 : f32
    %84 = vector.broadcast %cst_39 : f32 to vector<16x1xf32>
    %85 = arith.divf %83, %84 : vector<16x1xf32>
    %86 = vector.broadcast %78 : vector<16x1xf32> to vector<16x32xf32>
    %87 = arith.subf %70, %86 : vector<16x32xf32>
    %cst_40 = arith.constant 9.99999996E-13 : f32
    %88 = vector.broadcast %cst_40 : f32 to vector<16x1xf32>
    %89 = arith.addf %85, %88 : vector<16x1xf32>
    %90 = math.rsqrt %89 : vector<16x1xf32>
    %91 = vector.broadcast %90 : vector<16x1xf32> to vector<16x32xf32>
    %92 = arith.mulf %87, %91 : vector<16x32xf32>
    %93 = vector.broadcast %72 : vector<1x32xf32> to vector<16x32xf32>
    %94 = arith.mulf %92, %93 : vector<16x32xf32>
    %95 = vector.broadcast %74 : vector<1x32xf32> to vector<16x32xf32>
    %96 = arith.addf %94, %95 : vector<16x32xf32>
    %c0_41 = arith.constant 0 : index
    %c0_42 = arith.constant 0 : index
    %c0_43 = arith.constant 0 : index
    %97 = vector.load %arg9[%c0_41, %c0_42, %c0_43] : memref<1x32x64xf32, #tpu.memory_space<vmem>>, vector<1x32x64xf32>
    %98 = vector.shape_cast %97 : vector<1x32x64xf32> to vector<32x64xf32>
    %cst_44 = arith.constant dense<0.000000e+00> : vector<16x64xf32>
    %99 = tpu.matmul %96, %98, %cst_44 {dimension_numbers = #tpu.dot_dimension_numbers<[1], [0], [0], [1], [0, 0, 1, 1], [], []>} : vector<16x32xf32>, vector<32x64xf32>, vector<16x64xf32> -> vector<16x64xf32>
    %c0_45 = arith.constant 0 : index
    %c0_46 = arith.constant 0 : index
    %c0_47 = arith.constant 0 : index
    %100 = vector.load %arg10[%c0_45, %c0_46, %c0_47] : memref<1x1x64xf32, #tpu.memory_space<vmem>>, vector<1x1x64xf32>
    %101 = vector.shape_cast %100 : vector<1x1x64xf32> to vector<1x64xf32>
    %102 = vector.broadcast %101 : vector<1x64xf32> to vector<16x64xf32>
    %103 = arith.addf %99, %102 : vector<16x64xf32>
    %104 = arith.mulf %103, %103 : vector<16x64xf32>
    %105 = arith.mulf %103, %104 : vector<16x64xf32>
    %cst_48 = arith.constant 4.471500e-02 : f32
    %106 = vector.broadcast %cst_48 : f32 to vector<16x64xf32>
    %107 = arith.mulf %106, %105 : vector<16x64xf32>
    %108 = arith.addf %103, %107 : vector<16x64xf32>
    %cst_49 = arith.constant 0.797884583 : f32
    %109 = vector.broadcast %cst_49 : f32 to vector<16x64xf32>
    %110 = arith.mulf %109, %108 : vector<16x64xf32>
    %111 = math.tanh %110 : vector<16x64xf32>
    %cst_50 = arith.constant 1.000000e+00 : f32
    %112 = vector.broadcast %cst_50 : f32 to vector<16x64xf32>
    %113 = arith.addf %112, %111 : vector<16x64xf32>
    %cst_51 = arith.constant 5.000000e-01 : f32
    %114 = vector.broadcast %cst_51 : f32 to vector<16x64xf32>
    %115 = arith.mulf %114, %113 : vector<16x64xf32>
    %116 = arith.mulf %103, %115 : vector<16x64xf32>
    %c0_52 = arith.constant 0 : index
    %c0_53 = arith.constant 0 : index
    %c0_54 = arith.constant 0 : index
    %117 = vector.load %arg11[%c0_52, %c0_53, %c0_54] : memref<1x64x32xf32, #tpu.memory_space<vmem>>, vector<1x64x32xf32>
    %118 = vector.shape_cast %117 : vector<1x64x32xf32> to vector<64x32xf32>
    %cst_55 = arith.constant dense<0.000000e+00> : vector<16x32xf32>
    %119 = tpu.matmul %116, %118, %cst_55 {dimension_numbers = #tpu.dot_dimension_numbers<[1], [0], [0], [1], [0, 0, 1, 1], [], []>} : vector<16x64xf32>, vector<64x32xf32>, vector<16x32xf32> -> vector<16x32xf32>
    %c0_56 = arith.constant 0 : index
    %c0_57 = arith.constant 0 : index
    %c0_58 = arith.constant 0 : index
    %120 = vector.load %arg12[%c0_56, %c0_57, %c0_58] : memref<1x1x32xf32, #tpu.memory_space<vmem>>, vector<1x1x32xf32>
    %121 = vector.shape_cast %120 : vector<1x1x32xf32> to vector<1x32xf32>
    %122 = vector.broadcast %121 : vector<1x32xf32> to vector<16x32xf32>
    %123 = arith.addf %119, %122 : vector<16x32xf32>
    %124 = arith.addf %123, %96 : vector<16x32xf32>
    %c0_59 = arith.constant 0 : index
    %c0_60 = arith.constant 0 : index
    %c0_61 = arith.constant 0 : index
    %125 = vector.load %arg13[%c0_59, %c0_60, %c0_61] : memref<1x1x32xf32, #tpu.memory_space<vmem>>, vector<1x1x32xf32>
    %126 = vector.shape_cast %125 : vector<1x1x32xf32> to vector<1x32xf32>
    %c0_62 = arith.constant 0 : index
    %c0_63 = arith.constant 0 : index
    %c0_64 = arith.constant 0 : index
    %127 = vector.load %arg14[%c0_62, %c0_63, %c0_64] : memref<1x1x32xf32, #tpu.memory_space<vmem>>, vector<1x1x32xf32>
    %128 = vector.shape_cast %127 : vector<1x1x32xf32> to vector<1x32xf32>
    %cst_65 = arith.constant dense<0.000000e+00> : vector<16xf32>
    %129 = vector.multi_reduction <add>, %124, %cst_65 [1] : vector<16x32xf32> to vector<16xf32>
    %130 = vector.shape_cast %129 : vector<16xf32> to vector<16x1xf32>
    %cst_66 = arith.constant 3.200000e+01 : f32
    %131 = vector.broadcast %cst_66 : f32 to vector<16x1xf32>
    %132 = arith.divf %130, %131 : vector<16x1xf32>
    %133 = vector.broadcast %132 : vector<16x1xf32> to vector<16x32xf32>
    %134 = arith.subf %124, %133 : vector<16x32xf32>
    %135 = arith.mulf %134, %134 : vector<16x32xf32>
    %cst_67 = arith.constant dense<0.000000e+00> : vector<16xf32>
    %136 = vector.multi_reduction <add>, %135, %cst_67 [1] : vector<16x32xf32> to vector<16xf32>
    %137 = vector.shape_cast %136 : vector<16xf32> to vector<16x1xf32>
    %cst_68 = arith.constant 3.200000e+01 : f32
    %138 = vector.broadcast %cst_68 : f32 to vector<16x1xf32>
    %139 = arith.divf %137, %138 : vector<16x1xf32>
    %140 = vector.broadcast %132 : vector<16x1xf32> to vector<16x32xf32>
    %141 = arith.subf %124, %140 : vector<16x32xf32>
    %cst_69 = arith.constant 9.99999996E-13 : f32
    %142 = vector.broadcast %cst_69 : f32 to vector<16x1xf32>
    %143 = arith.addf %139, %142 : vector<16x1xf32>
    %144 = math.rsqrt %143 : vector<16x1xf32>
    %145 = vector.broadcast %144 : vector<16x1xf32> to vector<16x32xf32>
    %146 = arith.mulf %141, %145 : vector<16x32xf32>
    %147 = vector.broadcast %126 : vector<1x32xf32> to vector<16x32xf32>
    %148 = arith.mulf %146, %147 : vector<16x32xf32>
    %149 = vector.broadcast %128 : vector<1x32xf32> to vector<16x32xf32>
    %150 = arith.addf %148, %149 : vector<16x32xf32>
    %c0_70 = arith.constant 0 : index
    %c0_71 = arith.constant 0 : index
    %151 = vector.load %arg18[%c0_70, %c0_71] : memref<16x32xf32, #tpu.memory_space<vmem>>, vector<16x32xf32>
    tpu.vector_store %arg18[%c0_70, %c0_71], %150 {strides = array<i32>} : memref<16x32xf32, #tpu.memory_space<vmem>>, vector<16x32xf32>,
    %c1_i32 = arith.constant 1 : i32
    %152 = arith.cmpi eq, %arg0, %c1_i32 : i32
    %153 = arith.extui %152 : i1 to i32
    %c0_i32_72 = arith.constant 0 : i32
    %154 = arith.cmpi ne, %153, %c0_i32_72 : i32
    scf.if %154 {
      %155 = vector.shape_cast %150 : vector<16x32xf32> to vector<2x8x32xf32>
      %cst_73 = arith.constant dense<0.000000e+00> : vector<2x32xf32>
      %156 = vector.multi_reduction <add>, %155, %cst_73 [1] : vector<2x8x32xf32> to vector<2x32xf32>
      %cst_74 = arith.constant 8.000000e+00 : f32
      %157 = vector.broadcast %cst_74 : f32 to vector<2x32xf32>
      %158 = arith.divf %156, %157 : vector<2x32xf32>
      %c0_75 = arith.constant 0 : index
      %c0_76 = arith.constant 0 : index
      %159 = vector.load %arg15[%c0_75, %c0_76] : memref<32x128xf32, #tpu.memory_space<vmem>>, vector<32x128xf32>
      %cst_77 = arith.constant dense<0.000000e+00> : vector<2x128xf32>
      %160 = tpu.matmul %158, %159, %cst_77 {dimension_numbers = #tpu.dot_dimension_numbers<[1], [0], [0], [1], [0, 0, 1, 1], [], []>} : vector<2x32xf32>, vector<32x128xf32>, vector<2x128xf32> -> vector<2x128xf32>
      %c0_78 = arith.constant 0 : index
      %c0_79 = arith.constant 0 : index
      %161 = vector.load %arg16[%c0_78, %c0_79] : memref<1x128xf32, #tpu.memory_space<vmem>>, vector<1x128xf32>
      %162 = vector.broadcast %161 : vector<1x128xf32> to vector<2x128xf32>
      %163 = arith.addf %160, %162 : vector<2x128xf32>
      %c0_80 = arith.constant 0 : index
      %c0_81 = arith.constant 0 : index
      %164 = vector.load %arg17[%c0_80, %c0_81] : memref<2x128xf32, #tpu.memory_space<vmem>>, vector<2x128xf32>
      tpu.vector_store %arg17[%c0_80, %c0_81], %163 {strides = array<i32>} : memref<2x128xf32, #tpu.memory_space<vmem>>, vector<2x128xf32>,
    } else {
    }
    return
  }
  func.func @transform_0(%arg0: i32) -> (i32, i32) {
    %c0_i32 = arith.constant 0 : i32
    %c0_i32_0 = arith.constant 0 : i32
    %c0_i32_1 = arith.constant 0 : i32
    return %c0_i32, %c0_i32_0 : i32, i32
  }
  func.func @transform_1(%arg0: i32) -> (i32, i32) {
    %c0_i32 = arith.constant 0 : i32
    %c0_i32_0 = arith.constant 0 : i32
    %c0_i32_1 = arith.constant 0 : i32
    return %c0_i32, %c0_i32_0 : i32, i32
  }
  func.func @transform_2(%arg0: i32) -> (i32, i32, i32) {
    %c0_i32 = arith.constant 0 : i32
    %c0_i32_0 = arith.constant 0 : i32
    %c0_i32_1 = arith.constant 0 : i32
    return %arg0, %c0_i32, %c0_i32_0 : i32, i32, i32
  }
  func.func @transform_3(%arg0: i32) -> (i32, i32, i32) {
    %c0_i32 = arith.constant 0 : i32
    %c0_i32_0 = arith.constant 0 : i32
    %c0_i32_1 = arith.constant 0 : i32
    return %arg0, %c0_i32, %c0_i32_0 : i32, i32, i32
  }
  func.func @transform_4(%arg0: i32) -> (i32, i32, i32) {
    %c0_i32 = arith.constant 0 : i32
    %c0_i32_0 = arith.constant 0 : i32
    %c0_i32_1 = arith.constant 0 : i32
    return %arg0, %c0_i32, %c0_i32_0 : i32, i32, i32
  }
  func.func @transform_5(%arg0: i32) -> (i32, i32, i32) {
    %c0_i32 = arith.constant 0 : i32
    %c0_i32_0 = arith.constant 0 : i32
    %c0_i32_1 = arith.constant 0 : i32
    return %arg0, %c0_i32, %c0_i32_0 : i32, i32, i32
  }
  func.func @transform_6(%arg0: i32) -> (i32, i32, i32) {
    %c0_i32 = arith.constant 0 : i32
    %c0_i32_0 = arith.constant 0 : i32
    %c0_i32_1 = arith.constant 0 : i32
    return %arg0, %c0_i32, %c0_i32_0 : i32, i32, i32
  }
  func.func @transform_7(%arg0: i32) -> (i32, i32, i32) {
    %c0_i32 = arith.constant 0 : i32
    %c0_i32_0 = arith.constant 0 : i32
    %c0_i32_1 = arith.constant 0 : i32
    return %arg0, %c0_i32, %c0_i32_0 : i32, i32, i32
  }
  func.func @transform_8(%arg0: i32) -> (i32, i32, i32) {
    %c0_i32 = arith.constant 0 : i32
    %c0_i32_0 = arith.constant 0 : i32
    %c0_i32_1 = arith.constant 0 : i32
    return %arg0, %c0_i32, %c0_i32_0 : i32, i32, i32
  }
  func.func @transform_9(%arg0: i32) -> (i32, i32, i32) {
    %c0_i32 = arith.constant 0 : i32
    %c0_i32_0 = arith.constant 0 : i32
    %c0_i32_1 = arith.constant 0 : i32
    return %arg0, %c0_i32, %c0_i32_0 : i32, i32, i32
  }
  func.func @transform_10(%arg0: i32) -> (i32, i32, i32) {
    %c0_i32 = arith.constant 0 : i32
    %c0_i32_0 = arith.constant 0 : i32
    %c0_i32_1 = arith.constant 0 : i32
    return %arg0, %c0_i32, %c0_i32_0 : i32, i32, i32
  }
  func.func @transform_11(%arg0: i32) -> (i32, i32, i32) {
    %c0_i32 = arith.constant 0 : i32
    %c0_i32_0 = arith.constant 0 : i32
    %c0_i32_1 = arith.constant 0 : i32
    return %arg0, %c0_i32, %c0_i32_0 : i32, i32, i32
  }
  func.func @transform_12(%arg0: i32) -> (i32, i32, i32) {
    %c0_i32 = arith.constant 0 : i32
    %c0_i32_0 = arith.constant 0 : i32
    %c0_i32_1 = arith.constant 0 : i32
    return %arg0, %c0_i32, %c0_i32_0 : i32, i32, i32
  }
  func.func @transform_13(%arg0: i32) -> (i32, i32, i32) {
    %c0_i32 = arith.constant 0 : i32
    %c0_i32_0 = arith.constant 0 : i32
    %c0_i32_1 = arith.constant 0 : i32
    return %arg0, %c0_i32, %c0_i32_0 : i32, i32, i32
  }
  func.func @transform_14(%arg0: i32) -> (i32, i32) {
    %c0_i32 = arith.constant 0 : i32
    %c0_i32_0 = arith.constant 0 : i32
    %c0_i32_1 = arith.constant 0 : i32
    return %c0_i32, %c0_i32_0 : i32, i32
  }
  func.func @transform_15(%arg0: i32) -> (i32, i32) {
    %c0_i32 = arith.constant 0 : i32
    %c0_i32_0 = arith.constant 0 : i32
    %c0_i32_1 = arith.constant 0 : i32
    return %c0_i32, %c0_i32_0 : i32, i32
  }
  func.func @transform_16(%arg0: i32) -> (i32, i32) {
    %c0_i32 = arith.constant 0 : i32
    %c0_i32_0 = arith.constant 0 : i32
    %c0_i32_1 = arith.constant 0 : i32
    return %c0_i32, %c0_i32_0 : i32, i32
  }
}

</mosaic_0001>

<llo_original>
// kernel: xlnet_multilabel_forward.1
$region0: #{xlnet_multilabel_forward.1}
  #allocation0 [shape = 'u32[]', space=smem, size = 0x4, offset = 0x4, fixed_abs, tag = 'smem constant byte address 0x4 - core index']
  #allocation1 [shape = 'u32[144,128]{1,0:T(1,128)}', space=vmem, size = 0x12000, scoped, tag = 'internal scratch']
  #allocation2 [shape = 'f32[16,32]{1,0:T(8,128)}', space=vmem, size = 0x2000, scoped, tag = 'scratch operand']
  %s0 = inlined_call_operand.vmem [shape: f32[16,32], index: 0, kind: input, shape index: {}]
  %s1 = inlined_call_operand.vmem [shape: f32[2,8], index: 1, kind: input, shape index: {}]
  %s2 = inlined_call_operand.vmem [shape: f32[2,32,96], index: 2, kind: input, shape index: {}]
  %s3 = inlined_call_operand.vmem [shape: f32[2,1,96], index: 3, kind: input, shape index: {}]
  %s4 = inlined_call_operand.vmem [shape: f32[2,32,32], index: 4, kind: input, shape index: {}]
  %s5 = inlined_call_operand.vmem [shape: f32[2,1,32], index: 5, kind: input, shape index: {}]
  %s6 = inlined_call_operand.vmem [shape: f32[2,1,32], index: 6, kind: input, shape index: {}]
  %s7 = inlined_call_operand.vmem [shape: f32[2,1,32], index: 7, kind: input, shape index: {}]
  %s8 = inlined_call_operand.vmem [shape: f32[2,32,64], index: 8, kind: input, shape index: {}]
  %s9 = inlined_call_operand.vmem [shape: f32[2,1,64], index: 9, kind: input, shape index: {}]
  %s10 = inlined_call_operand.vmem [shape: f32[2,64,32], index: 10, kind: input, shape index: {}]
  %s11 = inlined_call_operand.vmem [shape: f32[2,1,32], index: 11, kind: input, shape index: {}]
  %s12 = inlined_call_operand.vmem [shape: f32[2,1,32], index: 12, kind: input, shape index: {}]
  %s13 = inlined_call_operand.vmem [shape: f32[2,1,32], index: 13, kind: input, shape index: {}]
  %s14 = inlined_call_operand.vmem [shape: f32[32,128], index: 14, kind: input, shape index: {}]
  %s15 = inlined_call_operand.vmem [shape: f32[1,128], index: 15, kind: input, shape index: {}]
  %s16 = inlined_call_operand.hbm [shape: f32[2,128], index: 16, kind: output, shape index: {}]
  %s17 = sld [smem:[#allocation0]]
  $region105: #{xlnet_multilabel_forward.1} parent=0
    _
  %s19 = ssub.s32 1, %s17
  %s20 = scalar_select 0, %s19, %s17
  $region1: #{xlnet_multilabel_forward.1} parent=0
    #allocation3 [shape = 'u8[1024]{0}', space=vmem, size = 0x400, scoped, tag = 'output window, operand 0, single buffered']
    #allocation4 [shape = 's32[2]{0}', space=sflag, size = 0x8, scoped, tag = 'scoped memory for xlnet_multilabel_forward.1']
    %21 = vsyncpa [#allocation4], 0
    loop: start=0, step=1, limit=4
    $region2: #{xlnet_multilabel_forward.1} parent=1 // loop_pre_header
      _
    $region3: #{xlnet_multilabel_forward.1} parent=1 // loop_header
      %s23 = sphi 0, %s27
      %p24 = scmp.ge.s32.totalorder %s23, 4
      %s31 = sphi 0, %s31
      %s33 = sphi 0, %s31
      %s34 = sphi 0, %s33
      %s48 = sphi 0, %s34
      %s52 = sphi 0, %s52
      %s54 = sphi 0, %s52
      %s55 = sphi 0, %s54
      %s69 = sphi 0, %s55
      %s75 = sphi 0, %s77
      %s78 = sphi 0, %s75
      %s79 = sphi 0, %s78
      %s95 = sphi 0, %s79
      %s101 = sphi 0, %s103
      %s104 = sphi 0, %s101
      %s105 = sphi 0, %s104
      %s121 = sphi 0, %s105
      %s127 = sphi 0, %s129
      %s130 = sphi 0, %s127
      %s131 = sphi 0, %s130
      %s147 = sphi 0, %s131
      %s153 = sphi 0, %s155
      %s156 = sphi 0, %s153
      %s157 = sphi 0, %s156
      %s173 = sphi 0, %s157
      %s179 = sphi 0, %s181
      %s182 = sphi 0, %s179
      %s183 = sphi 0, %s182
      %s199 = sphi 0, %s183
      %s205 = sphi 0, %s207
      %s208 = sphi 0, %s205
      %s209 = sphi 0, %s208
      %s225 = sphi 0, %s209
      %s231 = sphi 0, %s233
      %s234 = sphi 0, %s231
      %s235 = sphi 0, %s234
      %s251 = sphi 0, %s235
      %s257 = sphi 0, %s259
      %s260 = sphi 0, %s257
      %s261 = sphi 0, %s260
      %s277 = sphi 0, %s261
      %s283 = sphi 0, %s285
      %s286 = sphi 0, %s283
      %s287 = sphi 0, %s286
      %s303 = sphi 0, %s287
      %s309 = sphi 0, %s311
      %s312 = sphi 0, %s309
      %s313 = sphi 0, %s312
      %s329 = sphi 0, %s313
      %s335 = sphi 0, %s337
      %s338 = sphi 0, %s335
      %s339 = sphi 0, %s338
      %s355 = sphi 0, %s339
      %s361 = sphi 0, %s363
      %s364 = sphi 0, %s361
      %s365 = sphi 0, %s364
      %s381 = sphi 0, %s365
      %s385 = sphi 0, %s385
      %s387 = sphi 0, %s385
      %s388 = sphi 0, %s387
      %s402 = sphi 0, %s388
      %s406 = sphi 0, %s406
      %s408 = sphi 0, %s406
      %s409 = sphi 0, %s408
      %s423 = sphi 0, %s409
      %s427 = sphi 0, %s427
      %s429 = sphi 0, %s427
      %s430 = sphi 0, %s429
      %s444 = sphi 0, %s430
    $region4: #{xlnet_multilabel_forward.1} parent=1 // loop_header_branch
      %26 = sbr.rel (%p24) target = $region8
    $region5: #{xlnet_multilabel_forward.1} parent=1 // loop_body
      %s28 = ssub.s32 %s23, 1
      %s29 = ssub.s32 %s23, 2
      %s30 = sadd.s32 %s23, 1
      %s32 = sadd.s32 %s31, 1
      %p35 = scmp.eq.s32.totalorder %s23, 1
      %p36 = scmp.ne.s32.totalorder %s31, %s33
      %p37 = scmp.eq.s32.totalorder %s23, 0
      %p38 = por %p36, %p37
      %p39 = scmp.ne.s32.totalorder %s31, %s33
      %p40 = scmp.eq.s32.totalorder %s28, 1
      %p41 = por %p39, %p40
      %p42 = scmp.ne.s32.totalorder %s33, %s34
      %p43 = scmp.eq.s32.totalorder %s28, 0
      %p44 = por %p42, %p43
      %p45 = scmp.ne.s32.totalorder %s33, %s34
      %p46 = scmp.eq.s32.totalorder %s29, 1
      %p47 = por %p45, %p46
      %p49 = scmp.ne.s32.totalorder %s34, %s48
      %p50 = scmp.eq.s32.totalorder %s29, 0
      %p51 = por %p49, %p50
      %s53 = sadd.s32 %s52, 1
      %p56 = scmp.eq.s32.totalorder %s23, 1
      %p57 = scmp.ne.s32.totalorder %s52, %s54
      %p58 = scmp.eq.s32.totalorder %s23, 0
      %p59 = por %p57, %p58
      %p60 = scmp.ne.s32.totalorder %s52, %s54
      %p61 = scmp.eq.s32.totalorder %s28, 1
      %p62 = por %p60, %p61
      %p63 = scmp.ne.s32.totalorder %s54, %s55
      %p64 = scmp.eq.s32.totalorder %s28, 0
      %p65 = por %p63, %p64
      %p66 = scmp.ne.s32.totalorder %s54, %s55
      %p67 = scmp.eq.s32.totalorder %s29, 1
      %p68 = por %p66, %p67
      %p70 = scmp.ne.s32.totalorder %s55, %s69
      %p71 = scmp.eq.s32.totalorder %s29, 0
      %p72 = por %p70, %p71
      %s73 = ssub.s32 %s23, %s30
      %p74 = scmp.eq.s32.totalorder %s73, 0
      %s76 = sadd.s32 %s75, 1
      %s77 = scalar_select %p74, %s75, %s76
      %p80 = pneg %p74
      %p81 = scmp.eq.s32.totalorder %s23, 1
      %p82 = por %p80, %p81
      %p83 = scmp.ne.s32.totalorder %s75, %s78
      %p84 = scmp.eq.s32.totalorder %s23, 0
      %p85 = por %p83, %p84
      %p86 = scmp.ne.s32.totalorder %s75, %s78
      %p87 = scmp.eq.s32.totalorder %s28, 1
      %p88 = por %p86, %p87
      %p89 = scmp.ne.s32.totalorder %s78, %s79
      %p90 = scmp.eq.s32.totalorder %s28, 0
      %p91 = por %p89, %p90
      %p92 = scmp.ne.s32.totalorder %s78, %s79
      %p93 = scmp.eq.s32.totalorder %s29, 1
      %p94 = por %p92, %p93
      %p96 = scmp.ne.s32.totalorder %s79, %s95
      %p97 = scmp.eq.s32.totalorder %s29, 0
      %p98 = por %p96, %p97
      %s99 = ssub.s32 %s23, %s30
      %p100 = scmp.eq.s32.totalorder %s99, 0
      %s102 = sadd.s32 %s101, 1
      %s103 = scalar_select %p100, %s101, %s102
      %p106 = pneg %p100
      %p107 = scmp.eq.s32.totalorder %s23, 1
      %p108 = por %p106, %p107
      %p109 = scmp.ne.s32.totalorder %s101, %s104
      %p110 = scmp.eq.s32.totalorder %s23, 0
      %p111 = por %p109, %p110
      %p112 = scmp.ne.s32.totalorder %s101, %s104
      %p113 = scmp.eq.s32.totalorder %s28, 1
      %p114 = por %p112, %p113
      %p115 = scmp.ne.s32.totalorder %s104, %s105
      %p116 = scmp.eq.s32.totalorder %s28, 0
      %p117 = por %p115, %p116
      %p118 = scmp.ne.s32.totalorder %s104, %s105
      %p119 = scmp.eq.s32.totalorder %s29, 1
      %p120 = por %p118, %p119
      %p122 = scmp.ne.s32.totalorder %s105, %s121
      %p123 = scmp.eq.s32.totalorder %s29, 0
      %p124 = por %p122, %p123
      %s125 = ssub.s32 %s23, %s30
      %p126 = scmp.eq.s32.totalorder %s125, 0
      %s128 = sadd.s32 %s127, 1
      %s129 = scalar_select %p126, %s127, %s128
      %p132 = pneg %p126
      %p133 = scmp.eq.s32.totalorder %s23, 1
      %p134 = por %p132, %p133
      %p135 = scmp.ne.s32.totalorder %s127, %s130
      %p136 = scmp.eq.s32.totalorder %s23, 0
      %p137 = por %p135, %p136
      %p138 = scmp.ne.s32.totalorder %s127, %s130
      %p139 = scmp.eq.s32.totalorder %s28, 1
      %p140 = por %p138, %p139
      %p141 = scmp.ne.s32.totalorder %s130, %s131
      %p142 = scmp.eq.s32.totalorder %s28, 0
      %p143 = por %p141, %p142
      %p144 = scmp.ne.s32.totalorder %s130, %s131
      %p145 = scmp.eq.s32.totalorder %s29, 1
      %p146 = por %p144, %p145
      %p148 = scmp.ne.s32.totalorder %s131, %s147
      %p149 = scmp.eq.s32.totalorder %s29, 0
      %p150 = por %p148, %p149
      %s151 = ssub.s32 %s23, %s30
      %p152 = scmp.eq.s32.totalorder %s151, 0
      %s154 = sadd.s32 %s153, 1
      %s155 = scalar_select %p152, %s153, %s154
      %p158 = pneg %p152
      %p159 = scmp.eq.s32.totalorder %s23, 1
      %p160 = por %p158, %p159
      %p161 = scmp.ne.s32.totalorder %s153, %s156
      %p162 = scmp.eq.s32.totalorder %s23, 0
      %p163 = por %p161, %p162
      %p164 = scmp.ne.s32.totalorder %s153, %s156
      %p165 = scmp.eq.s32.totalorder %s28, 1
      %p166 = por %p164, %p165
      %p167 = scmp.ne.s32.totalorder %s156, %s157
      %p168 = scmp.eq.s32.totalorder %s28, 0
      %p169 = por %p167, %p168
      %p170 = scmp.ne.s32.totalorder %s156, %s157
      %p171 = scmp.eq.s32.totalorder %s29, 1
      %p172 = por %p170, %p171
      %p174 = scmp.ne.s32.totalorder %s157, %s173
      %p175 = scmp.eq.s32.totalorder %s29, 0
      %p176 = por %p174, %p175
      %s177 = ssub.s32 %s23, %s30
      %p178 = scmp.eq.s32.totalorder %s177, 0
      %s180 = sadd.s32 %s179, 1
      %s181 = scalar_select %p178, %s179, %s180
      %p184 = pneg %p178
      %p185 = scmp.eq.s32.totalorder %s23, 1
      %p186 = por %p184, %p185
      %p187 = scmp.ne.s32.totalorder %s179, %s182
      %p188 = scmp.eq.s32.totalorder %s23, 0
      %p189 = por %p187, %p188
      %p190 = scmp.ne.s32.totalorder %s179, %s182
      %p191 = scmp.eq.s32.totalorder %s28, 1
      %p192 = por %p190, %p191
      %p193 = scmp.ne.s32.totalorder %s182, %s183
      %p194 = scmp.eq.s32.totalorder %s28, 0
      %p195 = por %p193, %p194
      %p196 = scmp.ne.s32.totalorder %s182, %s183
      %p197 = scmp.eq.s32.totalorder %s29, 1
      %p198 = por %p196, %p197
      %p200 = scmp.ne.s32.totalorder %s183, %s199
      %p201 = scmp.eq.s32.totalorder %s29, 0
      %p202 = por %p200, %p201
      %s203 = ssub.s32 %s23, %s30
      %p204 = scmp.eq.s32.totalorder %s203, 0
      %s206 = sadd.s32 %s205, 1
      %s207 = scalar_select %p204, %s205, %s206
      %p210 = pneg %p204
      %p211 = scmp.eq.s32.totalorder %s23, 1
      %p212 = por %p210, %p211
      %p213 = scmp.ne.s32.totalorder %s205, %s208
      %p214 = scmp.eq.s32.totalorder %s23, 0
      %p215 = por %p213, %p214
      %p216 = scmp.ne.s32.totalorder %s205, %s208
      %p217 = scmp.eq.s32.totalorder %s28, 1
      %p218 = por %p216, %p217
      %p219 = scmp.ne.s32.totalorder %s208, %s209
      %p220 = scmp.eq.s32.totalorder %s28, 0
      %p221 = por %p219, %p220
      %p222 = scmp.ne.s32.totalorder %s208, %s209
      %p223 = scmp.eq.s32.totalorder %s29, 1
      %p224 = por %p222, %p223
      %p226 = scmp.ne.s32.totalorder %s209, %s225
      %p227 = scmp.eq.s32.totalorder %s29, 0
      %p228 = por %p226, %p227
      %s229 = ssub.s32 %s23, %s30
      %p230 = scmp.eq.s32.totalorder %s229, 0
      %s232 = sadd.s32 %s231, 1
      %s233 = scalar_select %p230, %s231, %s232
      %p236 = pneg %p230
      %p237 = scmp.eq.s32.totalorder %s23, 1
      %p238 = por %p236, %p237
      %p239 = scmp.ne.s32.totalorder %s231, %s234
      %p240 = scmp.eq.s32.totalorder %s23, 0
      %p241 = por %p239, %p240
      %p242 = scmp.ne.s32.totalorder %s231, %s234
      %p243 = scmp.eq.s32.totalorder %s28, 1
      %p244 = por %p242, %p243
      %p245 = scmp.ne.s32.totalorder %s234, %s235
      %p246 = scmp.eq.s32.totalorder %s28, 0
      %p247 = por %p245, %p246
      %p248 = scmp.ne.s32.totalorder %s234, %s235
      %p249 = scmp.eq.s32.totalorder %s29, 1
      %p250 = por %p248, %p249
      %p252 = scmp.ne.s32.totalorder %s235, %s251
      %p253 = scmp.eq.s32.totalorder %s29, 0
      %p254 = por %p252, %p253
      %s255 = ssub.s32 %s23, %s30
      %p256 = scmp.eq.s32.totalorder %s255, 0
      %s258 = sadd.s32 %s257, 1
      %s259 = scalar_select %p256, %s257, %s258
      %p262 = pneg %p256
      %p263 = scmp.eq.s32.totalorder %s23, 1
      %p264 = por %p262, %p263
      %p265 = scmp.ne.s32.totalorder %s257, %s260
      %p266 = scmp.eq.s32.totalorder %s23, 0
      %p267 = por %p265, %p266
      %p268 = scmp.ne.s32.totalorder %s257, %s260
      %p269 = scmp.eq.s32.totalorder %s28, 1
      %p270 = por %p268, %p269
      %p271 = scmp.ne.s32.totalorder %s260, %s261
      %p272 = scmp.eq.s32.totalorder %s28, 0
      %p273 = por %p271, %p272
      %p274 = scmp.ne.s32.totalorder %s260, %s261
      %p275 = scmp.eq.s32.totalorder %s29, 1
      %p276 = por %p274, %p275
      %p278 = scmp.ne.s32.totalorder %s261, %s277
      %p279 = scmp.eq.s32.totalorder %s29, 0
      %p280 = por %p278, %p279
      %s281 = ssub.s32 %s23, %s30
      %p282 = scmp.eq.s32.totalorder %s281, 0
      %s284 = sadd.s32 %s283, 1
      %s285 = scalar_select %p282, %s283, %s284
      %p288 = pneg %p282
      %p289 = scmp.eq.s32.totalorder %s23, 1
      %p290 = por %p288, %p289
      %p291 = scmp.ne.s32.totalorder %s283, %s286
      %p292 = scmp.eq.s32.totalorder %s23, 0
      %p293 = por %p291, %p292
      %p294 = scmp.ne.s32.totalorder %s283, %s286
      %p295 = scmp.eq.s32.totalorder %s28, 1
      %p296 = por %p294, %p295
      %p297 = scmp.ne.s32.totalorder %s286, %s287
      %p298 = scmp.eq.s32.totalorder %s28, 0
      %p299 = por %p297, %p298
      %p300 = scmp.ne.s32.totalorder %s286, %s287
      %p301 = scmp.eq.s32.totalorder %s29, 1
      %p302 = por %p300, %p301
      %p304 = scmp.ne.s32.totalorder %s287, %s303
      %p305 = scmp.eq.s32.totalorder %s29, 0
      %p306 = por %p304, %p305
      %s307 = ssub.s32 %s23, %s30
      %p308 = scmp.eq.s32.totalorder %s307, 0
      %s310 = sadd.s32 %s309, 1
      %s311 = scalar_select %p308, %s309, %s310
      %p314 = pneg %p308
      %p315 = scmp.eq.s32.totalorder %s23, 1
      %p316 = por %p314, %p315
      %p317 = scmp.ne.s32.totalorder %s309, %s312
      %p318 = scmp.eq.s32.totalorder %s23, 0
      %p319 = por %p317, %p318
      %p320 = scmp.ne.s32.totalorder %s309, %s312
      %p321 = scmp.eq.s32.totalorder %s28, 1
      %p322 = por %p320, %p321
      %p323 = scmp.ne.s32.totalorder %s312, %s313
      %p324 = scmp.eq.s32.totalorder %s28, 0
      %p325 = por %p323, %p324
      %p326 = scmp.ne.s32.totalorder %s312, %s313
      %p327 = scmp.eq.s32.totalorder %s29, 1
      %p328 = por %p326, %p327
      %p330 = scmp.ne.s32.totalorder %s313, %s329
      %p331 = scmp.eq.s32.totalorder %s29, 0
      %p332 = por %p330, %p331
      %s333 = ssub.s32 %s23, %s30
      %p334 = scmp.eq.s32.totalorder %s333, 0
      %s336 = sadd.s32 %s335, 1
      %s337 = scalar_select %p334, %s335, %s336
      %p340 = pneg %p334
      %p341 = scmp.eq.s32.totalorder %s23, 1
      %p342 = por %p340, %p341
      %p343 = scmp.ne.s32.totalorder %s335, %s338
      %p344 = scmp.eq.s32.totalorder %s23, 0
      %p345 = por %p343, %p344
      %p346 = scmp.ne.s32.totalorder %s335, %s338
      %p347 = scmp.eq.s32.totalorder %s28, 1
      %p348 = por %p346, %p347
      %p349 = scmp.ne.s32.totalorder %s338, %s339
      %p350 = scmp.eq.s32.totalorder %s28, 0
      %p351 = por %p349, %p350
      %p352 = scmp.ne.s32.totalorder %s338, %s339
      %p353 = scmp.eq.s32.totalorder %s29, 1
      %p354 = por %p352, %p353
      %p356 = scmp.ne.s32.totalorder %s339, %s355
      %p357 = scmp.eq.s32.totalorder %s29, 0
      %p358 = por %p356, %p357
      %s359 = ssub.s32 %s23, %s30
      %p360 = scmp.eq.s32.totalorder %s359, 0
      %s362 = sadd.s32 %s361, 1
      %s363 = scalar_select %p360, %s361, %s362
      %p366 = pneg %p360
      %p367 = scmp.eq.s32.totalorder %s23, 1
      %p368 = por %p366, %p367
      %p369 = scmp.ne.s32.totalorder %s361, %s364
      %p370 = scmp.eq.s32.totalorder %s23, 0
      %p371 = por %p369, %p370
      %p372 = scmp.ne.s32.totalorder %s361, %s364
      %p373 = scmp.eq.s32.totalorder %s28, 1
      %p374 = por %p372, %p373
      %p375 = scmp.ne.s32.totalorder %s364, %s365
      %p376 = scmp.eq.s32.totalorder %s28, 0
      %p377 = por %p375, %p376
      %p378 = scmp.ne.s32.totalorder %s364, %s365
      %p379 = scmp.eq.s32.totalorder %s29, 1
      %p380 = por %p378, %p379
      %p382 = scmp.ne.s32.totalorder %s365, %s381
      %p383 = scmp.eq.s32.totalorder %s29, 0
      %p384 = por %p382, %p383
      %s386 = sadd.s32 %s385, 1
      %p389 = scmp.eq.s32.totalorder %s23, 1
      %p390 = scmp.ne.s32.totalorder %s385, %s387
      %p391 = scmp.eq.s32.totalorder %s23, 0
      %p392 = por %p390, %p391
      %p393 = scmp.ne.s32.totalorder %s385, %s387
      %p394 = scmp.eq.s32.totalorder %s28, 1
      %p395 = por %p393, %p394
      %p396 = scmp.ne.s32.totalorder %s387, %s388
      %p397 = scmp.eq.s32.totalorder %s28, 0
      %p398 = por %p396, %p397
      %p399 = scmp.ne.s32.totalorder %s387, %s388
      %p400 = scmp.eq.s32.totalorder %s29, 1
      %p401 = por %p399, %p400
      %p403 = scmp.ne.s32.totalorder %s388, %s402
      %p404 = scmp.eq.s32.totalorder %s29, 0
      %p405 = por %p403, %p404
      %s407 = sadd.s32 %s406, 1
      %p410 = scmp.eq.s32.totalorder %s23, 1
      %p411 = scmp.ne.s32.totalorder %s406, %s408
      %p412 = scmp.eq.s32.totalorder %s23, 0
      %p413 = por %p411, %p412
      %p414 = scmp.ne.s32.totalorder %s406, %s408
      %p415 = scmp.eq.s32.totalorder %s28, 1
      %p416 = por %p414, %p415
      %p417 = scmp.ne.s32.totalorder %s408, %s409
      %p418 = scmp.eq.s32.totalorder %s28, 0
      %p419 = por %p417, %p418
      %p420 = scmp.ne.s32.totalorder %s408, %s409
      %p421 = scmp.eq.s32.totalorder %s29, 1
      %p422 = por %p420, %p421
      %p424 = scmp.ne.s32.totalorder %s409, %s423
      %p425 = scmp.eq.s32.totalorder %s29, 0
      %p426 = por %p424, %p425
      %s428 = sadd.s32 %s427, 1
      %p431 = scmp.eq.s32.totalorder %s23, 1
      %p432 = scmp.ne.s32.totalorder %s427, %s429
      %p433 = scmp.eq.s32.totalorder %s23, 0
      %p434 = por %p432, %p433
      %p435 = scmp.ne.s32.totalorder %s427, %s429
      %p436 = scmp.eq.s32.totalorder %s28, 1
      %p437 = por %p435, %p436
      %p438 = scmp.ne.s32.totalorder %s429, %s430
      %p439 = scmp.eq.s32.totalorder %s28, 0
      %p440 = por %p438, %p439
      %p441 = scmp.ne.s32.totalorder %s429, %s430
      %p442 = scmp.eq.s32.totalorder %s29, 1
      %p443 = por %p441, %p442
      %p445 = scmp.ne.s32.totalorder %s430, %s444
      %p446 = scmp.eq.s32.totalorder %s29, 0
      %p447 = por %p445, %p446
      %p448 = scmp.le.s32.totalorder 1, %s23
      %p449 = scmp.lt.s32.totalorder %s23, 3
      %p450 = pnand %p448, %p449
      %p451 = pneg %p450
      // Predicated region
      $region9: #{xlnet_multilabel_forward.1} parent=5 // pred_check
        _
      $region10: #{xlnet_multilabel_forward.1} parent=5 // pred_check_branch
        %453 = sbr.rel (%p450) target = $region12
      $region11: #{xlnet_multilabel_forward.1} parent=5 // pred_region
        %s454 = ssub.s32 %s23, 1
        // Predicated region
        $region13: #{xlnet_multilabel_forward.1} parent=11 // pred_check
          %p455 = pneg %p44
        $region14: #{xlnet_multilabel_forward.1} parent=11 // pred_check_branch
          %457 = sbr.rel (%p455) target = $region16
        $region15: #{xlnet_multilabel_forward.1} parent=11 // pred_region
          _
        $region16: #{xlnet_multilabel_forward.1} parent=11 // pred_fallthru
          _
        // Predicated region
        $region17: #{xlnet_multilabel_forward.1} parent=11 // pred_check
          %p458 = pneg %p65
        $region18: #{xlnet_multilabel_forward.1} parent=11 // pred_check_branch
          %460 = sbr.rel (%p458) target = $region20
        $region19: #{xlnet_multilabel_forward.1} parent=11 // pred_region
          _
        $region20: #{xlnet_multilabel_forward.1} parent=11 // pred_fallthru
          _
        // Predicated region
        $region21: #{xlnet_multilabel_forward.1} parent=11 // pred_check
          %p461 = pneg %p398
        $region22: #{xlnet_multilabel_forward.1} parent=11 // pred_check_branch
          %463 = sbr.rel (%p461) target = $region24
        $region23: #{xlnet_multilabel_forward.1} parent=11 // pred_region
          _
        $region24: #{xlnet_multilabel_forward.1} parent=11 // pred_fallthru
          _
        // Predicated region
        $region25: #{xlnet_multilabel_forward.1} parent=11 // pred_check
          %p464 = pneg %p419
        $region26: #{xlnet_multilabel_forward.1} parent=11 // pred_check_branch
          %466 = sbr.rel (%p464) target = $region28
        $region27: #{xlnet_multilabel_forward.1} parent=11 // pred_region
          _
        $region28: #{xlnet_multilabel_forward.1} parent=11 // pred_fallthru
          _
      $region12: #{xlnet_multilabel_forward.1} parent=5 // pred_fallthru
        _
      %p467 = scmp.lt.s32.totalorder %s23, 2
      // Predicated region
      $region29: #{xlnet_multilabel_forward.1} parent=5 // pred_check
        %p468 = pneg %p467
      $region30: #{xlnet_multilabel_forward.1} parent=5 // pred_check_branch
        %470 = sbr.rel (%p468) target = $region32
      $region31: #{xlnet_multilabel_forward.1} parent=5 // pred_region
        // Predicated region
        $region33: #{xlnet_multilabel_forward.1} parent=31 // pred_check
          %p471 = pneg %p85
        $region34: #{xlnet_multilabel_forward.1} parent=31 // pred_check_branch
          %473 = sbr.rel (%p471) target = $region36
        $region35: #{xlnet_multilabel_forward.1} parent=31 // pred_region
          %p474 = scmp.lt.s32.totalorder %s23, 1
          %s475 = scalar_select %p474, %s23, 1
          %s476 = smul.addr %s475, 4
          %s477 = smul.addr %s476, 8
          %s478 = scalar_lea.vmem %s2, %s477
        $region36: #{xlnet_multilabel_forward.1} parent=31 // pred_fallthru
          _
        // Predicated region
        $region37: #{xlnet_multilabel_forward.1} parent=31 // pred_check
          %p479 = pneg %p111
        $region38: #{xlnet_multilabel_forward.1} parent=31 // pred_check_branch
          %481 = sbr.rel (%p479) target = $region40
        $region39: #{xlnet_multilabel_forward.1} parent=31 // pred_region
          %p482 = scmp.lt.s32.totalorder %s23, 1
          %s483 = scalar_select %p482, %s23, 1
          %s484 = scalar_lea.vmem %s3, %s483
        $region40: #{xlnet_multilabel_forward.1} parent=31 // pred_fallthru
          _
        // Predicated region
        $region41: #{xlnet_multilabel_forward.1} parent=31 // pred_check
          %p485 = pneg %p137
        $region42: #{xlnet_multilabel_forward.1} parent=31 // pred_check_branch
          %487 = sbr.rel (%p485) target = $region44
        $region43: #{xlnet_multilabel_forward.1} parent=31 // pred_region
          %p488 = scmp.lt.s32.totalorder %s23, 1
          %s489 = scalar_select %p488, %s23, 1
          %s490 = smul.addr %s489, 4
          %s491 = smul.addr %s490, 8
          %s492 = scalar_lea.vmem %s4, %s491
        $region44: #{xlnet_multilabel_forward.1} parent=31 // pred_fallthru
          _
        // Predicated region
        $region45: #{xlnet_multilabel_forward.1} parent=31 // pred_check
          %p493 = pneg %p163
        $region46: #{xlnet_multilabel_forward.1} parent=31 // pred_check_branch
          %495 = sbr.rel (%p493) target = $region48
        $region47: #{xlnet_multilabel_forward.1} parent=31 // pred_region
          %p496 = scmp.lt.s32.totalorder %s23, 1
          %s497 = scalar_select %p496, %s23, 1
          %s498 = scalar_lea.vmem %s5, %s497
        $region48: #{xlnet_multilabel_forward.1} parent=31 // pred_fallthru
          _
        // Predicated region
        $region49: #{xlnet_multilabel_forward.1} parent=31 // pred_check
          %p499 = pneg %p189
        $region50: #{xlnet_multilabel_forward.1} parent=31 // pred_check_branch
          %501 = sbr.rel (%p499) target = $region52
        $region51: #{xlnet_multilabel_forward.1} parent=31 // pred_region
          %p502 = scmp.lt.s32.totalorder %s23, 1
          %s503 = scalar_select %p502, %s23, 1
          %s504 = scalar_lea.vmem %s6, %s503
        $region52: #{xlnet_multilabel_forward.1} parent=31 // pred_fallthru
          _
        // Predicated region
        $region53: #{xlnet_multilabel_forward.1} parent=31 // pred_check
          %p505 = pneg %p215
        $region54: #{xlnet_multilabel_forward.1} parent=31 // pred_check_branch
          %507 = sbr.rel (%p505) target = $region56
        $region55: #{xlnet_multilabel_forward.1} parent=31 // pred_region
          %p508 = scmp.lt.s32.totalorder %s23, 1
          %s509 = scalar_select %p508, %s23, 1
          %s510 = scalar_lea.vmem %s7, %s509
        $region56: #{xlnet_multilabel_forward.1} parent=31 // pred_fallthru
          _
        // Predicated region
        $region57: #{xlnet_multilabel_forward.1} parent=31 // pred_check
          %p511 = pneg %p241
        $region58: #{xlnet_multilabel_forward.1} parent=31 // pred_check_branch
          %513 = sbr.rel (%p511) target = $region60
        $region59: #{xlnet_multilabel_forward.1} parent=31 // pred_region
          %p514 = scmp.lt.s32.totalorder %s23, 1
          %s515 = scalar_select %p514, %s23, 1
          %s516 = smul.addr %s515, 4
          %s517 = smul.addr %s516, 8
          %s518 = scalar_lea.vmem %s8, %s517
        $region60: #{xlnet_multilabel_forward.1} parent=31 // pred_fallthru
          _
        // Predicated region
        $region61: #{xlnet_multilabel_forward.1} parent=31 // pred_check
          %p519 = pneg %p267
        $region62: #{xlnet_multilabel_forward.1} parent=31 // pred_check_branch
          %521 = sbr.rel (%p519) target = $region64
        $region63: #{xlnet_multilabel_forward.1} parent=31 // pred_region
          %p522 = scmp.lt.s32.totalorder %s23, 1
          %s523 = scalar_select %p522, %s23, 1
          %s524 = scalar_lea.vmem %s9, %s523
        $region64: #{xlnet_multilabel_forward.1} parent=31 // pred_fallthru
          _
        // Predicated region
        $region65: #{xlnet_multilabel_forward.1} parent=31 // pred_check
          %p525 = pneg %p293
        $region66: #{xlnet_multilabel_forward.1} parent=31 // pred_check_branch
          %527 = sbr.rel (%p525) target = $region68
        $region67: #{xlnet_multilabel_forward.1} parent=31 // pred_region
          %p528 = scmp.lt.s32.totalorder %s23, 1
          %s529 = scalar_select %p528, %s23, 1
          %s530 = smul.addr %s529, 8
          %s531 = smul.addr %s530, 8
          %s532 = scalar_lea.vmem %s10, %s531
        $region68: #{xlnet_multilabel_forward.1} parent=31 // pred_fallthru
          _
        // Predicated region
        $region69: #{xlnet_multilabel_forward.1} parent=31 // pred_check
          %p533 = pneg %p319
        $region70: #{xlnet_multilabel_forward.1} parent=31 // pred_check_branch
          %535 = sbr.rel (%p533) target = $region72
        $region71: #{xlnet_multilabel_forward.1} parent=31 // pred_region
          %p536 = scmp.lt.s32.totalorder %s23, 1
          %s537 = scalar_select %p536, %s23, 1
          %s538 = scalar_lea.vmem %s11, %s537
        $region72: #{xlnet_multilabel_forward.1} parent=31 // pred_fallthru
          _
        // Predicated region
        $region73: #{xlnet_multilabel_forward.1} parent=31 // pred_check
          %p539 = pneg %p345
        $region74: #{xlnet_multilabel_forward.1} parent=31 // pred_check_branch
          %541 = sbr.rel (%p539) target = $region76
        $region75: #{xlnet_multilabel_forward.1} parent=31 // pred_region
          %p542 = scmp.lt.s32.totalorder %s23, 1
          %s543 = scalar_select %p542, %s23, 1
          %s544 = scalar_lea.vmem %s12, %s543
        $region76: #{xlnet_multilabel_forward.1} parent=31 // pred_fallthru
          _
        // Predicated region
        $region77: #{xlnet_multilabel_forward.1} parent=31 // pred_check
          %p545 = pneg %p371
        $region78: #{xlnet_multilabel_forward.1} parent=31 // pred_check_branch
          %547 = sbr.rel (%p545) target = $region80
        $region79: #{xlnet_multilabel_forward.1} parent=31 // pred_region
          %p548 = scmp.lt.s32.totalorder %s23, 1
          %s549 = scalar_select %p548, %s23, 1
          %s550 = scalar_lea.vmem %s13, %s549
        $region80: #{xlnet_multilabel_forward.1} parent=31 // pred_fallthru
          _
      $region32: #{xlnet_multilabel_forward.1} parent=5 // pred_fallthru
        _
      %p551 = scmp.le.s32.totalorder 1, %s23
      %p552 = scmp.lt.s32.totalorder %s23, 3
      %p553 = pnand %p551, %p552
      %p554 = pneg %p553
      // Predicated region
      $region81: #{xlnet_multilabel_forward.1} parent=5 // pred_check
        _
      $region82: #{xlnet_multilabel_forward.1} parent=5 // pred_check_branch
        %556 = sbr.rel (%p553) target = $region84
      $region83: #{xlnet_multilabel_forward.1} parent=5 // pred_region
        %s557 = ssub.s32 %s23, 1
        %p558 = pneg %p44
        %p559 = pneg %p41
        %p560 = pneg %p65
        %p561 = pneg %p62
        %p562 = scmp.lt.s32.totalorder %s28, 1
        %s563 = scalar_select %p562, %s28, 1
        %s564 = smul.addr %s563, 4
        %s565 = smul.addr %s564, 8
        %s566 = scalar_lea.vmem %s2, %s565
        %p567 = pneg %p91
        %p568 = pneg %p88
        %p569 = scmp.lt.s32.totalorder %s28, 1
        %s570 = scalar_select %p569, %s28, 1
        %s571 = scalar_lea.vmem %s3, %s570
        %p572 = pneg %p117
        %p573 = pneg %p114
        %p574 = scmp.lt.s32.totalorder %s28, 1
        %s575 = scalar_select %p574, %s28, 1
        %s576 = smul.addr %s575, 4
        %s577 = smul.addr %s576, 8
        %s578 = scalar_lea.vmem %s4, %s577
        %p579 = pneg %p143
        %p580 = pneg %p140
        %p581 = scmp.lt.s32.totalorder %s28, 1
        %s582 = scalar_select %p581, %s28, 1
        %s583 = scalar_lea.vmem %s5, %s582
        %p584 = pneg %p169
        %p585 = pneg %p166
        %p586 = scmp.lt.s32.totalorder %s28, 1
        %s587 = scalar_select %p586, %s28, 1
        %s588 = scalar_lea.vmem %s6, %s587
        %p589 = pneg %p195
        %p590 = pneg %p192
        %p591 = scmp.lt.s32.totalorder %s28, 1
        %s592 = scalar_select %p591, %s28, 1
        %s593 = scalar_lea.vmem %s7, %s592
        %p594 = pneg %p221
        %p595 = pneg %p218
        %p596 = scmp.lt.s32.totalorder %s28, 1
        %s597 = scalar_select %p596, %s28, 1
        %s598 = smul.addr %s597, 4
        %s599 = smul.addr %s598, 8
        %s600 = scalar_lea.vmem %s8, %s599
        %p601 = pneg %p247
        %p602 = pneg %p244
        %p603 = scmp.lt.s32.totalorder %s28, 1
        %s604 = scalar_select %p603, %s28, 1
        %s605 = scalar_lea.vmem %s9, %s604
        %p606 = pneg %p273
        %p607 = pneg %p270
        %p608 = scmp.lt.s32.totalorder %s28, 1
        %s609 = scalar_select %p608, %s28, 1
        %s610 = smul.addr %s609, 8
        %s611 = smul.addr %s610, 8
        %s612 = scalar_lea.vmem %s10, %s611
        %p613 = pneg %p299
        %p614 = pneg %p296
        %p615 = scmp.lt.s32.totalorder %s28, 1
        %s616 = scalar_select %p615, %s28, 1
        %s617 = scalar_lea.vmem %s11, %s616
        %p618 = pneg %p325
        %p619 = pneg %p322
        %p620 = scmp.lt.s32.totalorder %s28, 1
        %s621 = scalar_select %p620, %s28, 1
        %s622 = scalar_lea.vmem %s12, %s621
        %p623 = pneg %p351
        %p624 = pneg %p348
        %p625 = scmp.lt.s32.totalorder %s28, 1
        %s626 = scalar_select %p625, %s28, 1
        %s627 = scalar_lea.vmem %s13, %s626
        %p628 = pneg %p377
        %p629 = pneg %p374
        %p630 = pneg %p398
        %p631 = pneg %p395
        %p632 = pneg %p419
        %p633 = pneg %p416
        %p634 = pneg %p440
        %p635 = pneg %p437
        %p636 = scmp.lt.s32.totalorder %s28, 1
        %s637 = scalar_select %p636, %s28, 1
        %s638 = smul.addr %s637, 4
        %s639 = smul.addr %s638, 8
        %s640 = scalar_lea.vmem %s2, %s639
        %p641 = scmp.lt.s32.totalorder %s28, 1
        %s642 = scalar_select %p641, %s28, 1
        %s643 = scalar_lea.vmem %s3, %s642
        %p644 = scmp.lt.s32.totalorder %s28, 1
        %s645 = scalar_select %p644, %s28, 1
        %s646 = smul.addr %s645, 4
        %s647 = smul.addr %s646, 8
        %s648 = scalar_lea.vmem %s4, %s647
        %p649 = scmp.lt.s32.totalorder %s28, 1
        %s650 = scalar_select %p649, %s28, 1
        %s651 = scalar_lea.vmem %s5, %s650
        %p652 = scmp.lt.s32.totalorder %s28, 1
        %s653 = scalar_select %p652, %s28, 1
        %s654 = scalar_lea.vmem %s6, %s653
        %p655 = scmp.lt.s32.totalorder %s28, 1
        %s656 = scalar_select %p655, %s28, 1
        %s657 = scalar_lea.vmem %s7, %s656
        %p658 = scmp.lt.s32.totalorder %s28, 1
        %s659 = scalar_select %p658, %s28, 1
        %s660 = smul.addr %s659, 4
        %s661 = smul.addr %s660, 8
        %s662 = scalar_lea.vmem %s8, %s661
        %p663 = scmp.lt.s32.totalorder %s28, 1
        %s664 = scalar_select %p663, %s28, 1
        %s665 = scalar_lea.vmem %s9, %s664
        %p666 = scmp.lt.s32.totalorder %s28, 1
        %s667 = scalar_select %p666, %s28, 1
        %s668 = smul.addr %s667, 8
        %s669 = smul.addr %s668, 8
        %s670 = scalar_lea.vmem %s10, %s669
        %p671 = scmp.lt.s32.totalorder %s28, 1
        %s672 = scalar_select %p671, %s28, 1
        %s673 = scalar_lea.vmem %s11, %s672
        %p674 = scmp.lt.s32.totalorder %s28, 1
        %s675 = scalar_select %p674, %s28, 1
        %s676 = scalar_lea.vmem %s12, %s675
        %p677 = scmp.lt.s32.totalorder %s28, 1
        %s678 = scalar_select %p677, %s28, 1
        %s679 = scalar_lea.vmem %s13, %s678
        %p680 = scmp.eq.s32.totalorder %s28, 0
        // Predicated region
        $region85: #{xlnet_multilabel_forward.1} parent=83 // pred_check
          %p681 = pneg %p680
        $region86: #{xlnet_multilabel_forward.1} parent=83 // pred_check_branch
          %683 = sbr.rel (%p681) target = $region88
        $region87: #{xlnet_multilabel_forward.1} parent=83 // pred_region
          %v684 = vld [vmem:[%s0] sm:$0xff]
          %v685 = vld [vmem:[%s0 + $0x8] sm:$0xff]
          %vm686 = vcmask 261120
          %687 = vst.msk [vmem:[#allocation2] sm:$0xff] %vm686, %v684
          %688 = vst.msk [vmem:[#allocation2 + $0x8] sm:$0xff] %vm686, %v685
        $region88: #{xlnet_multilabel_forward.1} parent=83 // pred_fallthru
          _
        %v689 = vld [vmem:[#allocation2] sm:$0xff]
        %v690 = vld [vmem:[#allocation2 + $0x8] sm:$0xff]
        %v691 = vld [vmem:[%s640] sm:$0xff]
        %v692 = vld [vmem:[%s640 + $0x8] sm:$0xff]
        %v693 = vld [vmem:[%s640 + $0x10] sm:$0xff]
        %v694 = vld [vmem:[%s640 + $0x18] sm:$0xff]
        %v695 = vld [vmem:[%s643] sm:$0x1]
        %v697 = vlaneseq
        %v698 = vshrl.u32 %v697, 7
        %v699 = vsub.s32 0, %v698
        %v700 = vrot.slane %v695, %v699
        %vm702 = vcmask 261120
        %v704 = vsel %vm702, %v689, 0
        %v707 = vsel %vm702, %v690, 0
        %709 = vmatprep.subr.mxu0 0.0
        %710 = vmatpush1.msra.mxu0 %v691
        %711 = vmatprep.subr.mxu0 0.0
        %712 = vmatpush1.msra.mxu0 %v692
        %713 = vmatprep.subr.mxu0 0.0
        %714 = vmatpush1.msra.mxu0 %v693
        %715 = vmatprep.subr.mxu0 0.0
        %716 = vmatpush1.msra.mxu0 %v694
        %717 = vmatprep.subr.mxu0 0.0
        %718 = vmatpush1.msra.mxu0 0.0
        %719 = vmatprep.subr.mxu0 0.0
        %720 = vmatpush1.msra.mxu0 0.0
        %721 = vmatprep.subr.mxu0 0.0
        %722 = vmatpush1.msra.mxu0 0.0
        %723 = vmatprep.subr.mxu0 0.0
        %724 = vmatpush1.msra.mxu0 0.0
        %725 = vmatprep.subr.mxu0 0.0
        %726 = vmatpush1.msra.mxu0 0.0
        %727 = vmatprep.subr.mxu0 0.0
        %728 = vmatpush1.msra.mxu0 0.0
        %729 = vmatprep.subr.mxu0 0.0
        %730 = vmatpush1.msra.mxu0 0.0
        %731 = vmatprep.subr.mxu0 0.0
        %732 = vmatpush1.msra.mxu0 0.0
        %733 = vmatprep.subr.mxu0 0.0
        %734 = vmatpush1.msra.mxu0 0.0
        %735 = vmatprep.subr.mxu0 0.0
        %736 = vmatpush1.msra.mxu0 0.0
        %737 = vmatprep.subr.mxu0 0.0
        %738 = vmatpush1.msra.mxu0 0.0
        %739 = vmatprep.subr.mxu0 0.0
        %740 = vmatpush1.msra.mxu0 0.0
        %741 = vmatprep.subr.mxu0 0.0
        %742 = vmatpush1.msra.mxu0 0.0
        %743 = vmatprep.subr.mxu0 0.0
        %744 = vmatpush1.msra.mxu0 0.0
        %745 = vmatprep.subr.mxu0 0.0
        %746 = vmatpush1.msra.mxu0 0.0
        %747 = vmatprep.subr.mxu0 0.0
        %748 = vmatpush1.msra.mxu0 0.0
        %749 = vmatprep.subr.mxu0 0.0
        %750 = vmatpush1.msra.mxu0 0.0
        %751 = vmatprep.subr.mxu0 0.0
        %752 = vmatpush1.msra.mxu0 0.0
        %753 = vmatprep.subr.mxu0 0.0
        %754 = vmatpush1.msra.mxu0 0.0
        %755 = vmatprep.subr.mxu0 0.0
        %756 = vmatpush1.msra.mxu0 0.0
        %757 = vmatprep.subr.mxu0 0.0
        %758 = vmatpush1.msra.mxu0 0.0
        %759 = vmatprep.subr.mxu0 0.0
        %760 = vmatpush1.msra.mxu0 0.0
        %761 = vmatprep.subr.mxu0 0.0
        %762 = vmatpush1.msra.mxu0 0.0
        %763 = vmatprep.subr.mxu0 0.0
        %764 = vmatpush1.msra.mxu0 0.0
        %765 = vmatprep.subr.mxu0 0.0
        %766 = vmatpush1.msra.mxu0 0.0
        %767 = vmatprep.subr.mxu0 0.0
        %768 = vmatpush1.msra.mxu0 0.0
        %769 = vmatprep.subr.mxu0 0.0
        %770 = vmatpush1.msra.mxu0 0.0
        %771 = vmatprep.subr.mxu0 0.0
        %772 = vmatpush1.msra.mxu0 0.0
        %773 = vmatprep.mubr.f32.mxu0 0.0
        %774 = vmatmul.mubr.f32.gmra.mrb[0].mxu0 %v704
        %v775 = vpop.f32.mrb[0].mxu0
        %v776 = vadd.f32 %v700, %v775
        %v777 = vpop.f32.mrb[0].mxu0
        %778 = vmatprep.mubr.f32.mxu0 0.0
        %779 = vmatmul.mubr.f32.gmra.mrb[0].mxu0 %v707
        %v780 = vpop.f32.mrb[0].mxu0
        %v781 = vadd.f32 %v700, %v780
        %v782 = vpop.f32.mrb[0].mxu0
        %783 = vdwg.mxu0
        %v784 = vld [vmem:[%s1] sm:$0x3]
        %v787 = vunpack.c.l.s4 1966171168
        %v788 = vunpack.c.0.s8 %v787
        %v789 = vlaneseq
        %v790 = vshrl.u32 %v789, 7
        %v791 = vsub.s32 %v788, %v790
        %v792 = vrot.slane %v784, %v791
        %v793 = vcombine.high %v792, %v792
        %v795 = vunpack.c.l.s4 1966171168
        %v796 = vunpack.c.0.s8 %v795
        %v797 = vlaneseq
        %v798 = vshrl.u32 %v797, 7
        %v799 = vsub.s32 %v796, %v798
        %v800 = vrot.slane %v792, %v799
        %v802 = vunpack.c.l.s4 1966171168
        %v803 = vunpack.c.0.s8 %v802
        %v804 = vlaneseq
        %v805 = vshrl.u32 %v804, 7
        %v806 = vsub.s32 %v803, %v805
        %v807 = vrot.slane %v793, %v806
        %809 = vrot.lane.b32.xlu0 %v776, 96
        %v810 = vpop.permute.xlu0 %809
        %vm811 = vcmask 130048
        %v812 = vsel %vm811, %v776, 0
        %v814 = vsel %vm811, %v810, 0
        %816 = vmatprep.subr.mxu0 0.0
        %817 = vmatpush1.xpose.msra.mxu0 %v814
        %818 = vmatprep.subr.mxu0 0.0
        %819 = vmatpush1.xpose.msra.mxu0 0.0
        %820 = vmatprep.subr.mxu0 0.0
        %821 = vmatpush1.xpose.msra.mxu0 0.0
        %822 = vmatprep.subr.mxu0 0.0
        %823 = vmatpush1.xpose.msra.mxu0 0.0
        %824 = vmatprep.subr.mxu0 0.0
        %825 = vmatpush1.xpose.msra.mxu0 0.0
        %826 = vmatprep.subr.mxu0 0.0
        %827 = vmatpush1.xpose.msra.mxu0 0.0
        %828 = vmatprep.subr.mxu0 0.0
        %829 = vmatpush1.xpose.msra.mxu0 0.0
        %830 = vmatprep.subr.mxu0 0.0
        %831 = vmatpush1.xpose.msra.mxu0 0.0
        %832 = vmatprep.subr.mxu0 0.0
        %833 = vmatpush1.xpose.msra.mxu0 0.0
        %834 = vmatprep.subr.mxu0 0.0
        %835 = vmatpush1.xpose.msra.mxu0 0.0
        %836 = vmatprep.subr.mxu0 0.0
        %837 = vmatpush1.xpose.msra.mxu0 0.0
        %838 = vmatprep.subr.mxu0 0.0
        %839 = vmatpush1.xpose.msra.mxu0 0.0
        %840 = vmatprep.subr.mxu0 0.0
        %841 = vmatpush1.xpose.msra.mxu0 0.0
        %842 = vmatprep.subr.mxu0 0.0
        %843 = vmatpush1.xpose.msra.mxu0 0.0
        %844 = vmatprep.subr.mxu0 0.0
        %845 = vmatpush1.xpose.msra.mxu0 0.0
        %846 = vmatprep.subr.mxu0 0.0
        %847 = vmatpush1.xpose.msra.mxu0 0.0
        %848 = vmatprep.subr.mxu0 0.0
        %849 = vmatpush1.xpose.msra.mxu0 0.0
        %850 = vmatprep.subr.mxu0 0.0
        %851 = vmatpush1.xpose.msra.mxu0 0.0
        %852 = vmatprep.subr.mxu0 0.0
        %853 = vmatpush1.xpose.msra.mxu0 0.0
        %854 = vmatprep.subr.mxu0 0.0
        %855 = vmatpush1.xpose.msra.mxu0 0.0
        %856 = vmatprep.subr.mxu0 0.0
        %857 = vmatpush1.xpose.msra.mxu0 0.0
        %858 = vmatprep.subr.mxu0 0.0
        %859 = vmatpush1.xpose.msra.mxu0 0.0
        %860 = vmatprep.subr.mxu0 0.0
        %861 = vmatpush1.xpose.msra.mxu0 0.0
        %862 = vmatprep.subr.mxu0 0.0
        %863 = vmatpush1.xpose.msra.mxu0 0.0
        %864 = vmatprep.subr.mxu0 0.0
        %865 = vmatpush1.xpose.msra.mxu0 0.0
        %866 = vmatprep.subr.mxu0 0.0
        %867 = vmatpush1.xpose.msra.mxu0 0.0
        %868 = vmatprep.subr.mxu0 0.0
        %869 = vmatpush1.xpose.msra.mxu0 0.0
        %870 = vmatprep.subr.mxu0 0.0
        %871 = vmatpush1.xpose.msra.mxu0 0.0
        %872 = vmatprep.subr.mxu0 0.0
        %873 = vmatpush1.xpose.msra.mxu0 0.0
        %874 = vmatprep.subr.mxu0 0.0
        %875 = vmatpush1.xpose.msra.mxu0 0.0
        %876 = vmatprep.subr.mxu0 0.0
        %877 = vmatpush1.xpose.msra.mxu0 0.0
        %878 = vmatprep.subr.mxu0 0.0
        %879 = vmatpush1.xpose.msra.mxu0 0.0
        %880 = vmatprep.mubr.f32.mxu0 0.0
        %881 = vmatmul.mubr.f32.gmra.mrb[0].mxu0 %v812
        %v882 = vpop.f32.mrb[0].mxu0
        %v883 = vadd.f32 0.0, %v882
        %v884 = vpop.f32.mrb[0].mxu0
        %885 = vdwg.mxu0
        %887 = vrot.lane.b32.xlu0 %v781, 96
        %v888 = vpop.permute.xlu0 %887
        %v889 = vsel %vm811, %v781, 0
        %v891 = vsel %vm811, %v888, 0
        %893 = vmatprep.subr.mxu0 0.0
        %894 = vmatpush1.xpose.msra.mxu0 %v891
        %895 = vmatprep.subr.mxu0 0.0
        %896 = vmatpush1.xpose.msra.mxu0 0.0
        %897 = vmatprep.subr.mxu0 0.0
        %898 = vmatpush1.xpose.msra.mxu0 0.0
        %899 = vmatprep.subr.mxu0 0.0
        %900 = vmatpush1.xpose.msra.mxu0 0.0
        %901 = vmatprep.subr.mxu0 0.0
        %902 = vmatpush1.xpose.msra.mxu0 0.0
        %903 = vmatprep.subr.mxu0 0.0
        %904 = vmatpush1.xpose.msra.mxu0 0.0
        %905 = vmatprep.subr.mxu0 0.0
        %906 = vmatpush1.xpose.msra.mxu0 0.0
        %907 = vmatprep.subr.mxu0 0.0
        %908 = vmatpush1.xpose.msra.mxu0 0.0
        %909 = vmatprep.subr.mxu0 0.0
        %910 = vmatpush1.xpose.msra.mxu0 0.0
        %911 = vmatprep.subr.mxu0 0.0
        %912 = vmatpush1.xpose.msra.mxu0 0.0
        %913 = vmatprep.subr.mxu0 0.0
        %914 = vmatpush1.xpose.msra.mxu0 0.0
        %915 = vmatprep.subr.mxu0 0.0
        %916 = vmatpush1.xpose.msra.mxu0 0.0
        %917 = vmatprep.subr.mxu0 0.0
        %918 = vmatpush1.xpose.msra.mxu0 0.0
        %919 = vmatprep.subr.mxu0 0.0
        %920 = vmatpush1.xpose.msra.mxu0 0.0
        %921 = vmatprep.subr.mxu0 0.0
        %922 = vmatpush1.xpose.msra.mxu0 0.0
        %923 = vmatprep.subr.mxu0 0.0
        %924 = vmatpush1.xpose.msra.mxu0 0.0
        %925 = vmatprep.subr.mxu0 0.0
        %926 = vmatpush1.xpose.msra.mxu0 0.0
        %927 = vmatprep.subr.mxu0 0.0
        %928 = vmatpush1.xpose.msra.mxu0 0.0
        %929 = vmatprep.subr.mxu0 0.0
        %930 = vmatpush1.xpose.msra.mxu0 0.0
        %931 = vmatprep.subr.mxu0 0.0
        %932 = vmatpush1.xpose.msra.mxu0 0.0
        %933 = vmatprep.subr.mxu0 0.0
        %934 = vmatpush1.xpose.msra.mxu0 0.0
        %935 = vmatprep.subr.mxu0 0.0
        %936 = vmatpush1.xpose.msra.mxu0 0.0
        %937 = vmatprep.subr.mxu0 0.0
        %938 = vmatpush1.xpose.msra.mxu0 0.0
        %939 = vmatprep.subr.mxu0 0.0
        %940 = vmatpush1.xpose.msra.mxu0 0.0
        %941 = vmatprep.subr.mxu0 0.0
        %942 = vmatpush1.xpose.msra.mxu0 0.0
        %943 = vmatprep.subr.mxu0 0.0
        %944 = vmatpush1.xpose.msra.mxu0 0.0
        %945 = vmatprep.subr.mxu0 0.0
        %946 = vmatpush1.xpose.msra.mxu0 0.0
        %947 = vmatprep.subr.mxu0 0.0
        %948 = vmatpush1.xpose.msra.mxu0 0.0
        %949 = vmatprep.subr.mxu0 0.0
        %950 = vmatpush1.xpose.msra.mxu0 0.0
        %951 = vmatprep.subr.mxu0 0.0
        %952 = vmatpush1.xpose.msra.mxu0 0.0
        %953 = vmatprep.subr.mxu0 0.0
        %954 = vmatpush1.xpose.msra.mxu0 0.0
        %955 = vmatprep.subr.mxu0 0.0
        %956 = vmatpush1.xpose.msra.mxu0 0.0
        %957 = vmatprep.mubr.f32.mxu0 0.0
        %958 = vmatmul.mubr.f32.gmra.mrb[0].mxu0 %v889
        %v959 = vpop.f32.mrb[0].mxu0
        %v960 = vadd.f32 0.0, %v959
        %v961 = vpop.f32.mrb[0].mxu0
        %962 = vdwg.mxu0
        %v963 = vmul.f32 %v883, 0.25
        %v964 = vmul.f32 %v960, 0.25
        %v965 = vlaneseq
        %v966 = vshrl.u32 %v965, 7
        %v967 = vsub.s32 0, %v966
        %v968 = vrot.slane %v800, %v967
        %v969 = vlaneseq
        %v970 = vshrl.u32 %v969, 7
        %v971 = vsub.s32 0, %v970
        %v972 = vrot.slane %v807, %v971
        %v975 = vadd.f32 %v963, %v968
        %v976 = vadd.f32 %v964, %v972
        %vm977 = vcmask 64512
        %v978 = vsel %vm977, %v975, -inf
        %979 = vmax.xlane.f32.xlu0 %v978
        %v980 = vpop.xlane.xlu0 %979
        %v981 = vsel %vm977, %v976, -inf
        %982 = vmax.xlane.f32.xlu0 %v981
        %v983 = vpop.xlane.xlu0 %982
        %v984 = vsub.f32 %v975, %v980
        %v985 = vsub.f32 %v976, %v983
        %v986 = vmul.f32 %v984, 1.442695
        %v987 = vpow.pop %v986
        %v988 = vmul.f32 %v985, 1.442695
        %v989 = vpow.pop %v988
        %v990 = vsel %vm977, %v987, 0.0
        %991 = vadd.xlane.f32.xlu0 %v990
        %v992 = vpop.xlane.xlu0 %991
        %v993 = vsel %vm977, %v989, 0.0
        %994 = vadd.xlane.f32.xlu0 %v993
        %v995 = vpop.xlane.xlu0 %994
        %v996 = vrcp.pop %v992
        %v997 = vrcp.pop %v995
        %v998 = vmul.f32 %v987, %v996
        %v999 = vmul.f32 %v989, %v997
        %1000 = vrot.lane.b32.xlu0 %v776, 64
        %v1001 = vpop.permute.xlu0 %1000
        %v1004 = vsel %vm977, %v998, 0
        %1006 = vmatprep.subr.mxu0 0.0
        %1007 = vmatpush1.msra.mxu0 %v1001
        %1008 = vmatprep.subr.mxu0 0.0
        %1009 = vmatpush1.msra.mxu0 0.0
        %1010 = vmatprep.subr.mxu0 0.0
        %1011 = vmatpush1.msra.mxu0 0.0
        %1012 = vmatprep.subr.mxu0 0.0
        %1013 = vmatpush1.msra.mxu0 0.0
        %1014 = vmatprep.subr.mxu0 0.0
        %1015 = vmatpush1.msra.mxu0 0.0
        %1016 = vmatprep.subr.mxu0 0.0
        %1017 = vmatpush1.msra.mxu0 0.0
        %1018 = vmatprep.subr.mxu0 0.0
        %1019 = vmatpush1.msra.mxu0 0.0
        %1020 = vmatprep.subr.mxu0 0.0
        %1021 = vmatpush1.msra.mxu0 0.0
        %1022 = vmatprep.subr.mxu0 0.0
        %1023 = vmatpush1.msra.mxu0 0.0
        %1024 = vmatprep.subr.mxu0 0.0
        %1025 = vmatpush1.msra.mxu0 0.0
        %1026 = vmatprep.subr.mxu0 0.0
        %1027 = vmatpush1.msra.mxu0 0.0
        %1028 = vmatprep.subr.mxu0 0.0
        %1029 = vmatpush1.msra.mxu0 0.0
        %1030 = vmatprep.subr.mxu0 0.0
        %1031 = vmatpush1.msra.mxu0 0.0
        %1032 = vmatprep.subr.mxu0 0.0
        %1033 = vmatpush1.msra.mxu0 0.0
        %1034 = vmatprep.subr.mxu0 0.0
        %1035 = vmatpush1.msra.mxu0 0.0
        %1036 = vmatprep.subr.mxu0 0.0
        %1037 = vmatpush1.msra.mxu0 0.0
        %1038 = vmatprep.subr.mxu0 0.0
        %1039 = vmatpush1.msra.mxu0 0.0
        %1040 = vmatprep.subr.mxu0 0.0
        %1041 = vmatpush1.msra.mxu0 0.0
        %1042 = vmatprep.subr.mxu0 0.0
        %1043 = vmatpush1.msra.mxu0 0.0
        %1044 = vmatprep.subr.mxu0 0.0
        %1045 = vmatpush1.msra.mxu0 0.0
        %1046 = vmatprep.subr.mxu0 0.0
        %1047 = vmatpush1.msra.mxu0 0.0
        %1048 = vmatprep.subr.mxu0 0.0
        %1049 = vmatpush1.msra.mxu0 0.0
        %1050 = vmatprep.subr.mxu0 0.0
        %1051 = vmatpush1.msra.mxu0 0.0
        %1052 = vmatprep.subr.mxu0 0.0
        %1053 = vmatpush1.msra.mxu0 0.0
        %1054 = vmatprep.subr.mxu0 0.0
        %1055 = vmatpush1.msra.mxu0 0.0
        %1056 = vmatprep.subr.mxu0 0.0
        %1057 = vmatpush1.msra.mxu0 0.0
        %1058 = vmatprep.subr.mxu0 0.0
        %1059 = vmatpush1.msra.mxu0 0.0
        %1060 = vmatprep.subr.mxu0 0.0
        %1061 = vmatpush1.msra.mxu0 0.0
        %1062 = vmatprep.subr.mxu0 0.0
        %1063 = vmatpush1.msra.mxu0 0.0
        %1064 = vmatprep.subr.mxu0 0.0
        %1065 = vmatpush1.msra.mxu0 0.0
        %1066 = vmatprep.subr.mxu0 0.0
        %1067 = vmatpush1.msra.mxu0 0.0
        %1068 = vmatprep.subr.mxu0 0.0
        %1069 = vmatpush1.msra.mxu0 0.0
        %1070 = vmatprep.mubr.f32.mxu0 0.0
        %1071 = vmatmul.mubr.f32.gmra.mrb[0].mxu0 %v1004
        %v1072 = vpop.f32.mrb[0].mxu0
        %v1073 = vadd.f32 0.0, %v1072
        %v1074 = vpop.f32.mrb[0].mxu0
        %1075 = vdwg.mxu0
        %1076 = vrot.lane.b32.xlu0 %v781, 64
        %v1077 = vpop.permute.xlu0 %1076
        %v1080 = vsel %vm977, %v999, 0
        %1082 = vmatprep.subr.mxu0 0.0
        %1083 = vmatpush1.msra.mxu0 %v1077
        %1084 = vmatprep.subr.mxu0 0.0
        %1085 = vmatpush1.msra.mxu0 0.0
        %1086 = vmatprep.subr.mxu0 0.0
        %1087 = vmatpush1.msra.mxu0 0.0
        %1088 = vmatprep.subr.mxu0 0.0
        %1089 = vmatpush1.msra.mxu0 0.0
        %1090 = vmatprep.subr.mxu0 0.0
        %1091 = vmatpush1.msra.mxu0 0.0
        %1092 = vmatprep.subr.mxu0 0.0
        %1093 = vmatpush1.msra.mxu0 0.0
        %1094 = vmatprep.subr.mxu0 0.0
        %1095 = vmatpush1.msra.mxu0 0.0
        %1096 = vmatprep.subr.mxu0 0.0
        %1097 = vmatpush1.msra.mxu0 0.0
        %1098 = vmatprep.subr.mxu0 0.0
        %1099 = vmatpush1.msra.mxu0 0.0
        %1100 = vmatprep.subr.mxu0 0.0
        %1101 = vmatpush1.msra.mxu0 0.0
        %1102 = vmatprep.subr.mxu0 0.0
        %1103 = vmatpush1.msra.mxu0 0.0
        %1104 = vmatprep.subr.mxu0 0.0
        %1105 = vmatpush1.msra.mxu0 0.0
        %1106 = vmatprep.subr.mxu0 0.0
        %1107 = vmatpush1.msra.mxu0 0.0
        %1108 = vmatprep.subr.mxu0 0.0
        %1109 = vmatpush1.msra.mxu0 0.0
        %1110 = vmatprep.subr.mxu0 0.0
        %1111 = vmatpush1.msra.mxu0 0.0
        %1112 = vmatprep.subr.mxu0 0.0
        %1113 = vmatpush1.msra.mxu0 0.0
        %1114 = vmatprep.subr.mxu0 0.0
        %1115 = vmatpush1.msra.mxu0 0.0
        %1116 = vmatprep.subr.mxu0 0.0
        %1117 = vmatpush1.msra.mxu0 0.0
        %1118 = vmatprep.subr.mxu0 0.0
        %1119 = vmatpush1.msra.mxu0 0.0
        %1120 = vmatprep.subr.mxu0 0.0
        %1121 = vmatpush1.msra.mxu0 0.0
        %1122 = vmatprep.subr.mxu0 0.0
        %1123 = vmatpush1.msra.mxu0 0.0
        %1124 = vmatprep.subr.mxu0 0.0
        %1125 = vmatpush1.msra.mxu0 0.0
        %1126 = vmatprep.subr.mxu0 0.0
        %1127 = vmatpush1.msra.mxu0 0.0
        %1128 = vmatprep.subr.mxu0 0.0
        %1129 = vmatpush1.msra.mxu0 0.0
        %1130 = vmatprep.subr.mxu0 0.0
        %1131 = vmatpush1.msra.mxu0 0.0
        %1132 = vmatprep.subr.mxu0 0.0
        %1133 = vmatpush1.msra.mxu0 0.0
        %1134 = vmatprep.subr.mxu0 0.0
        %1135 = vmatpush1.msra.mxu0 0.0
        %1136 = vmatprep.subr.mxu0 0.0
        %1137 = vmatpush1.msra.mxu0 0.0
        %1138 = vmatprep.subr.mxu0 0.0
        %1139 = vmatpush1.msra.mxu0 0.0
        %1140 = vmatprep.subr.mxu0 0.0
        %1141 = vmatpush1.msra.mxu0 0.0
        %1142 = vmatprep.subr.mxu0 0.0
        %1143 = vmatpush1.msra.mxu0 0.0
        %1144 = vmatprep.subr.mxu0 0.0
        %1145 = vmatpush1.msra.mxu0 0.0
        %1146 = vmatprep.mubr.f32.mxu0 0.0
        %1147 = vmatmul.mubr.f32.gmra.mrb[0].mxu0 %v1080
        %v1148 = vpop.f32.mrb[0].mxu0
        %v1149 = vadd.f32 0.0, %v1148
        %v1150 = vpop.f32.mrb[0].mxu0
        %1151 = vdwg.mxu0
        %v1152 = vld [vmem:[%s648] sm:$0xff]
        %v1153 = vld [vmem:[%s648 + $0x8] sm:$0xff]
        %1154 = vrot.lane.b32.xlu0 %v776, 112
        %v1155 = vpop.permute.xlu0 %1154
        %1156 = vrot.lane.b32.xlu0 %v776, 80
        %v1157 = vpop.permute.xlu0 %1156
        %v1158 = vsel %vm811, %v1155, 0
        %v1160 = vsel %vm811, %v1157, 0
        %1162 = vmatprep.subr.mxu0 0.0
        %1163 = vmatpush1.xpose.msra.mxu0 %v1160
        %1164 = vmatprep.subr.mxu0 0.0
        %1165 = vmatpush1.xpose.msra.mxu0 0.0
        %1166 = vmatprep.subr.mxu0 0.0
        %1167 = vmatpush1.xpose.msra.mxu0 0.0
        %1168 = vmatprep.subr.mxu0 0.0
        %1169 = vmatpush1.xpose.msra.mxu0 0.0
        %1170 = vmatprep.subr.mxu0 0.0
        %1171 = vmatpush1.xpose.msra.mxu0 0.0
        %1172 = vmatprep.subr.mxu0 0.0
        %1173 = vmatpush1.xpose.msra.mxu0 0.0
        %1174 = vmatprep.subr.mxu0 0.0
        %1175 = vmatpush1.xpose.msra.mxu0 0.0
        %1176 = vmatprep.subr.mxu0 0.0
        %1177 = vmatpush1.xpose.msra.mxu0 0.0
        %1178 = vmatprep.subr.mxu0 0.0
        %1179 = vmatpush1.xpose.msra.mxu0 0.0
        %1180 = vmatprep.subr.mxu0 0.0
        %1181 = vmatpush1.xpose.msra.mxu0 0.0
        %1182 = vmatprep.subr.mxu0 0.0
        %1183 = vmatpush1.xpose.msra.mxu0 0.0
        %1184 = vmatprep.subr.mxu0 0.0
        %1185 = vmatpush1.xpose.msra.mxu0 0.0
        %1186 = vmatprep.subr.mxu0 0.0
        %1187 = vmatpush1.xpose.msra.mxu0 0.0
        %1188 = vmatprep.subr.mxu0 0.0
        %1189 = vmatpush1.xpose.msra.mxu0 0.0
        %1190 = vmatprep.subr.mxu0 0.0
        %1191 = vmatpush1.xpose.msra.mxu0 0.0
        %1192 = vmatprep.subr.mxu0 0.0
        %1193 = vmatpush1.xpose.msra.mxu0 0.0
        %1194 = vmatprep.subr.mxu0 0.0
        %1195 = vmatpush1.xpose.msra.mxu0 0.0
        %1196 = vmatprep.subr.mxu0 0.0
        %1197 = vmatpush1.xpose.msra.mxu0 0.0
        %1198 = vmatprep.subr.mxu0 0.0
        %1199 = vmatpush1.xpose.msra.mxu0 0.0
        %1200 = vmatprep.subr.mxu0 0.0
        %1201 = vmatpush1.xpose.msra.mxu0 0.0
        %1202 = vmatprep.subr.mxu0 0.0
        %1203 = vmatpush1.xpose.msra.mxu0 0.0
        %1204 = vmatprep.subr.mxu0 0.0
        %1205 = vmatpush1.xpose.msra.mxu0 0.0
        %1206 = vmatprep.subr.mxu0 0.0
        %1207 = vmatpush1.xpose.msra.mxu0 0.0
        %1208 = vmatprep.subr.mxu0 0.0
        %1209 = vmatpush1.xpose.msra.mxu0 0.0
        %1210 = vmatprep.subr.mxu0 0.0
        %1211 = vmatpush1.xpose.msra.mxu0 0.0
        %1212 = vmatprep.subr.mxu0 0.0
        %1213 = vmatpush1.xpose.msra.mxu0 0.0
        %1214 = vmatprep.subr.mxu0 0.0
        %1215 = vmatpush1.xpose.msra.mxu0 0.0
        %1216 = vmatprep.subr.mxu0 0.0
        %1217 = vmatpush1.xpose.msra.mxu0 0.0
        %1218 = vmatprep.subr.mxu0 0.0
        %1219 = vmatpush1.xpose.msra.mxu0 0.0
        %1220 = vmatprep.subr.mxu0 0.0
        %1221 = vmatpush1.xpose.msra.mxu0 0.0
        %1222 = vmatprep.subr.mxu0 0.0
        %1223 = vmatpush1.xpose.msra.mxu0 0.0
        %1224 = vmatprep.subr.mxu0 0.0
        %1225 = vmatpush1.xpose.msra.mxu0 0.0
        %1226 = vmatprep.mubr.f32.mxu0 0.0
        %1227 = vmatmul.mubr.f32.gmra.mrb[0].mxu0 %v1158
        %v1228 = vpop.f32.mrb[0].mxu0
        %v1229 = vadd.f32 0.0, %v1228
        %v1230 = vpop.f32.mrb[0].mxu0
        %1231 = vdwg.mxu0
        %1232 = vrot.lane.b32.xlu0 %v781, 112
        %v1233 = vpop.permute.xlu0 %1232
        %1234 = vrot.lane.b32.xlu0 %v781, 80
        %v1235 = vpop.permute.xlu0 %1234
        %v1236 = vsel %vm811, %v1233, 0
        %v1238 = vsel %vm811, %v1235, 0
        %1240 = vmatprep.subr.mxu0 0.0
        %1241 = vmatpush1.xpose.msra.mxu0 %v1238
        %1242 = vmatprep.subr.mxu0 0.0
        %1243 = vmatpush1.xpose.msra.mxu0 0.0
        %1244 = vmatprep.subr.mxu0 0.0
        %1245 = vmatpush1.xpose.msra.mxu0 0.0
        %1246 = vmatprep.subr.mxu0 0.0
        %1247 = vmatpush1.xpose.msra.mxu0 0.0
        %1248 = vmatprep.subr.mxu0 0.0
        %1249 = vmatpush1.xpose.msra.mxu0 0.0
        %1250 = vmatprep.subr.mxu0 0.0
        %1251 = vmatpush1.xpose.msra.mxu0 0.0
        %1252 = vmatprep.subr.mxu0 0.0
        %1253 = vmatpush1.xpose.msra.mxu0 0.0
        %1254 = vmatprep.subr.mxu0 0.0
        %1255 = vmatpush1.xpose.msra.mxu0 0.0
        %1256 = vmatprep.subr.mxu0 0.0
        %1257 = vmatpush1.xpose.msra.mxu0 0.0
        %1258 = vmatprep.subr.mxu0 0.0
        %1259 = vmatpush1.xpose.msra.mxu0 0.0
        %1260 = vmatprep.subr.mxu0 0.0
        %1261 = vmatpush1.xpose.msra.mxu0 0.0
        %1262 = vmatprep.subr.mxu0 0.0
        %1263 = vmatpush1.xpose.msra.mxu0 0.0
        %1264 = vmatprep.subr.mxu0 0.0
        %1265 = vmatpush1.xpose.msra.mxu0 0.0
        %1266 = vmatprep.subr.mxu0 0.0
        %1267 = vmatpush1.xpose.msra.mxu0 0.0
        %1268 = vmatprep.subr.mxu0 0.0
        %1269 = vmatpush1.xpose.msra.mxu0 0.0
        %1270 = vmatprep.subr.mxu0 0.0
        %1271 = vmatpush1.xpose.msra.mxu0 0.0
        %1272 = vmatprep.subr.mxu0 0.0
        %1273 = vmatpush1.xpose.msra.mxu0 0.0
        %1274 = vmatprep.subr.mxu0 0.0
        %1275 = vmatpush1.xpose.msra.mxu0 0.0
        %1276 = vmatprep.subr.mxu0 0.0
        %1277 = vmatpush1.xpose.msra.mxu0 0.0
        %1278 = vmatprep.subr.mxu0 0.0
        %1279 = vmatpush1.xpose.msra.mxu0 0.0
        %1280 = vmatprep.subr.mxu0 0.0
        %1281 = vmatpush1.xpose.msra.mxu0 0.0
        %1282 = vmatprep.subr.mxu0 0.0
        %1283 = vmatpush1.xpose.msra.mxu0 0.0
        %1284 = vmatprep.subr.mxu0 0.0
        %1285 = vmatpush1.xpose.msra.mxu0 0.0
        %1286 = vmatprep.subr.mxu0 0.0
        %1287 = vmatpush1.xpose.msra.mxu0 0.0
        %1288 = vmatprep.subr.mxu0 0.0
        %1289 = vmatpush1.xpose.msra.mxu0 0.0
        %1290 = vmatprep.subr.mxu0 0.0
        %1291 = vmatpush1.xpose.msra.mxu0 0.0
        %1292 = vmatprep.subr.mxu0 0.0
        %1293 = vmatpush1.xpose.msra.mxu0 0.0
        %1294 = vmatprep.subr.mxu0 0.0
        %1295 = vmatpush1.xpose.msra.mxu0 0.0
        %1296 = vmatprep.subr.mxu0 0.0
        %1297 = vmatpush1.xpose.msra.mxu0 0.0
        %1298 = vmatprep.subr.mxu0 0.0
        %1299 = vmatpush1.xpose.msra.mxu0 0.0
        %1300 = vmatprep.subr.mxu0 0.0
        %1301 = vmatpush1.xpose.msra.mxu0 0.0
        %1302 = vmatprep.subr.mxu0 0.0
        %1303 = vmatpush1.xpose.msra.mxu0 0.0
        %1304 = vmatprep.mubr.f32.mxu0 0.0
        %1305 = vmatmul.mubr.f32.gmra.mrb[0].mxu0 %v1236
        %v1306 = vpop.f32.mrb[0].mxu0
        %v1307 = vadd.f32 0.0, %v1306
        %v1308 = vpop.f32.mrb[0].mxu0
        %1309 = vdwg.mxu0
        %v1310 = vmul.f32 %v1229, 0.25
        %v1311 = vmul.f32 %v1307, 0.25
        %v1312 = vadd.f32 %v1310, %v968
        %v1313 = vadd.f32 %v1311, %v972
        %v1314 = vsel %vm977, %v1312, -inf
        %1315 = vmax.xlane.f32.xlu0 %v1314
        %v1316 = vpop.xlane.xlu0 %1315
        %v1317 = vsel %vm977, %v1313, -inf
        %1318 = vmax.xlane.f32.xlu0 %v1317
        %v1319 = vpop.xlane.xlu0 %1318
        %v1320 = vsub.f32 %v1312, %v1316
        %v1321 = vsub.f32 %v1313, %v1319
        %v1322 = vmul.f32 %v1320, 1.442695
        %v1323 = vpow.pop %v1322
        %v1324 = vmul.f32 %v1321, 1.442695
        %v1325 = vpow.pop %v1324
        %v1326 = vsel %vm977, %v1323, 0.0
        %1327 = vadd.xlane.f32.xlu0 %v1326
        %v1328 = vpop.xlane.xlu0 %1327
        %v1329 = vsel %vm977, %v1325, 0.0
        %1330 = vadd.xlane.f32.xlu0 %v1329
        %v1331 = vpop.xlane.xlu0 %1330
        %v1332 = vrcp.pop %v1328
        %v1333 = vrcp.pop %v1331
        %v1334 = vmul.f32 %v1323, %v1332
        %v1335 = vmul.f32 %v1325, %v1333
        %1336 = vrot.lane.b32.xlu0 %v776, 48
        %v1337 = vpop.permute.xlu0 %1336
        %v1340 = vsel %vm977, %v1334, 0
        %1342 = vmatprep.subr.mxu0 0.0
        %1343 = vmatpush1.msra.mxu0 %v1337
        %1344 = vmatprep.subr.mxu0 0.0
        %1345 = vmatpush1.msra.mxu0 0.0
        %1346 = vmatprep.subr.mxu0 0.0
        %1347 = vmatpush1.msra.mxu0 0.0
        %1348 = vmatprep.subr.mxu0 0.0
        %1349 = vmatpush1.msra.mxu0 0.0
        %1350 = vmatprep.subr.mxu0 0.0
        %1351 = vmatpush1.msra.mxu0 0.0
        %1352 = vmatprep.subr.mxu0 0.0
        %1353 = vmatpush1.msra.mxu0 0.0
        %1354 = vmatprep.subr.mxu0 0.0
        %1355 = vmatpush1.msra.mxu0 0.0
        %1356 = vmatprep.subr.mxu0 0.0
        %1357 = vmatpush1.msra.mxu0 0.0
        %1358 = vmatprep.subr.mxu0 0.0
        %1359 = vmatpush1.msra.mxu0 0.0
        %1360 = vmatprep.subr.mxu0 0.0
        %1361 = vmatpush1.msra.mxu0 0.0
        %1362 = vmatprep.subr.mxu0 0.0
        %1363 = vmatpush1.msra.mxu0 0.0
        %1364 = vmatprep.subr.mxu0 0.0
        %1365 = vmatpush1.msra.mxu0 0.0
        %1366 = vmatprep.subr.mxu0 0.0
        %1367 = vmatpush1.msra.mxu0 0.0
        %1368 = vmatprep.subr.mxu0 0.0
        %1369 = vmatpush1.msra.mxu0 0.0
        %1370 = vmatprep.subr.mxu0 0.0
        %1371 = vmatpush1.msra.mxu0 0.0
        %1372 = vmatprep.subr.mxu0 0.0
        %1373 = vmatpush1.msra.mxu0 0.0
        %1374 = vmatprep.subr.mxu0 0.0
        %1375 = vmatpush1.msra.mxu0 0.0
        %1376 = vmatprep.subr.mxu0 0.0
        %1377 = vmatpush1.msra.mxu0 0.0
        %1378 = vmatprep.subr.mxu0 0.0
        %1379 = vmatpush1.msra.mxu0 0.0
        %1380 = vmatprep.subr.mxu0 0.0
        %1381 = vmatpush1.msra.mxu0 0.0
        %1382 = vmatprep.subr.mxu0 0.0
        %1383 = vmatpush1.msra.mxu0 0.0
        %1384 = vmatprep.subr.mxu0 0.0
        %1385 = vmatpush1.msra.mxu0 0.0
        %1386 = vmatprep.subr.mxu0 0.0
        %1387 = vmatpush1.msra.mxu0 0.0
        %1388 = vmatprep.subr.mxu0 0.0
        %1389 = vmatpush1.msra.mxu0 0.0
        %1390 = vmatprep.subr.mxu0 0.0
        %1391 = vmatpush1.msra.mxu0 0.0
        %1392 = vmatprep.subr.mxu0 0.0
        %1393 = vmatpush1.msra.mxu0 0.0
        %1394 = vmatprep.subr.mxu0 0.0
        %1395 = vmatpush1.msra.mxu0 0.0
        %1396 = vmatprep.subr.mxu0 0.0
        %1397 = vmatpush1.msra.mxu0 0.0
        %1398 = vmatprep.subr.mxu0 0.0
        %1399 = vmatpush1.msra.mxu0 0.0
        %1400 = vmatprep.subr.mxu0 0.0
        %1401 = vmatpush1.msra.mxu0 0.0
        %1402 = vmatprep.subr.mxu0 0.0
        %1403 = vmatpush1.msra.mxu0 0.0
        %1404 = vmatprep.subr.mxu0 0.0
        %1405 = vmatpush1.msra.mxu0 0.0
        %1406 = vmatprep.mubr.f32.mxu0 0.0
        %1407 = vmatmul.mubr.f32.gmra.mrb[0].mxu0 %v1340
        %v1408 = vpop.f32.mrb[0].mxu0
        %v1409 = vadd.f32 0.0, %v1408
        %v1410 = vpop.f32.mrb[0].mxu0
        %1411 = vdwg.mxu0
        %1412 = vrot.lane.b32.xlu0 %v781, 48
        %v1413 = vpop.permute.xlu0 %1412
        %v1416 = vsel %vm977, %v1335, 0
        %1418 = vmatprep.subr.mxu0 0.0
        %1419 = vmatpush1.msra.mxu0 %v1413
        %1420 = vmatprep.subr.mxu0 0.0
        %1421 = vmatpush1.msra.mxu0 0.0
        %1422 = vmatprep.subr.mxu0 0.0
        %1423 = vmatpush1.msra.mxu0 0.0
        %1424 = vmatprep.subr.mxu0 0.0
        %1425 = vmatpush1.msra.mxu0 0.0
        %1426 = vmatprep.subr.mxu0 0.0
        %1427 = vmatpush1.msra.mxu0 0.0
        %1428 = vmatprep.subr.mxu0 0.0
        %1429 = vmatpush1.msra.mxu0 0.0
        %1430 = vmatprep.subr.mxu0 0.0
        %1431 = vmatpush1.msra.mxu0 0.0
        %1432 = vmatprep.subr.mxu0 0.0
        %1433 = vmatpush1.msra.mxu0 0.0
        %1434 = vmatprep.subr.mxu0 0.0
        %1435 = vmatpush1.msra.mxu0 0.0
        %1436 = vmatprep.subr.mxu0 0.0
        %1437 = vmatpush1.msra.mxu0 0.0
        %1438 = vmatprep.subr.mxu0 0.0
        %1439 = vmatpush1.msra.mxu0 0.0
        %1440 = vmatprep.subr.mxu0 0.0
        %1441 = vmatpush1.msra.mxu0 0.0
        %1442 = vmatprep.subr.mxu0 0.0
        %1443 = vmatpush1.msra.mxu0 0.0
        %1444 = vmatprep.subr.mxu0 0.0
        %1445 = vmatpush1.msra.mxu0 0.0
        %1446 = vmatprep.subr.mxu0 0.0
        %1447 = vmatpush1.msra.mxu0 0.0
        %1448 = vmatprep.subr.mxu0 0.0
        %1449 = vmatpush1.msra.mxu0 0.0
        %1450 = vmatprep.subr.mxu0 0.0
        %1451 = vmatpush1.msra.mxu0 0.0
        %1452 = vmatprep.subr.mxu0 0.0
        %1453 = vmatpush1.msra.mxu0 0.0
        %1454 = vmatprep.subr.mxu0 0.0
        %1455 = vmatpush1.msra.mxu0 0.0
        %1456 = vmatprep.subr.mxu0 0.0
        %1457 = vmatpush1.msra.mxu0 0.0
        %1458 = vmatprep.subr.mxu0 0.0
        %1459 = vmatpush1.msra.mxu0 0.0
        %1460 = vmatprep.subr.mxu0 0.0
        %1461 = vmatpush1.msra.mxu0 0.0
        %1462 = vmatprep.subr.mxu0 0.0
        %1463 = vmatpush1.msra.mxu0 0.0
        %1464 = vmatprep.subr.mxu0 0.0
        %1465 = vmatpush1.msra.mxu0 0.0
        %1466 = vmatprep.subr.mxu0 0.0
        %1467 = vmatpush1.msra.mxu0 0.0
        %1468 = vmatprep.subr.mxu0 0.0
        %1469 = vmatpush1.msra.mxu0 0.0
        %1470 = vmatprep.subr.mxu0 0.0
        %1471 = vmatpush1.msra.mxu0 0.0
        %1472 = vmatprep.subr.mxu0 0.0
        %1473 = vmatpush1.msra.mxu0 0.0
        %1474 = vmatprep.subr.mxu0 0.0
        %1475 = vmatpush1.msra.mxu0 0.0
        %1476 = vmatprep.subr.mxu0 0.0
        %1477 = vmatpush1.msra.mxu0 0.0
        %1478 = vmatprep.subr.mxu0 0.0
        %1479 = vmatpush1.msra.mxu0 0.0
        %1480 = vmatprep.subr.mxu0 0.0
        %1481 = vmatpush1.msra.mxu0 0.0
        %1482 = vmatprep.mubr.f32.mxu0 0.0
        %1483 = vmatmul.mubr.f32.gmra.mrb[0].mxu0 %v1416
        %v1484 = vpop.f32.mrb[0].mxu0
        %v1485 = vadd.f32 0.0, %v1484
        %v1486 = vpop.f32.mrb[0].mxu0
        %1487 = vdwg.mxu0
        %v1488 = vld [vmem:[%s648 + $0x10] sm:$0xff]
        %v1489 = vld [vmem:[%s648 + $0x18] sm:$0xff]
        %v1491 = vsel %vm811, %v1409, 0
        %v1494 = vsel %vm811, %v1485, 0
        %1496 = vmatprep.subr.mxu0 0.0
        %1497 = vmatpush1.msra.mxu0 %v1488
        %1498 = vmatprep.subr.mxu0 0.0
        %1499 = vmatpush1.msra.mxu0 %v1489
        %1500 = vmatprep.subr.mxu0 0.0
        %1501 = vmatpush1.msra.mxu0 0.0
        %1502 = vmatprep.subr.mxu0 0.0
        %1503 = vmatpush1.msra.mxu0 0.0
        %1504 = vmatprep.subr.mxu0 0.0
        %1505 = vmatpush1.msra.mxu0 0.0
        %1506 = vmatprep.subr.mxu0 0.0
        %1507 = vmatpush1.msra.mxu0 0.0
        %1508 = vmatprep.subr.mxu0 0.0
        %1509 = vmatpush1.msra.mxu0 0.0
        %1510 = vmatprep.subr.mxu0 0.0
        %1511 = vmatpush1.msra.mxu0 0.0
        %1512 = vmatprep.subr.mxu0 0.0
        %1513 = vmatpush1.msra.mxu0 0.0
        %1514 = vmatprep.subr.mxu0 0.0
        %1515 = vmatpush1.msra.mxu0 0.0
        %1516 = vmatprep.subr.mxu0 0.0
        %1517 = vmatpush1.msra.mxu0 0.0
        %1518 = vmatprep.subr.mxu0 0.0
        %1519 = vmatpush1.msra.mxu0 0.0
        %1520 = vmatprep.subr.mxu0 0.0
        %1521 = vmatpush1.msra.mxu0 0.0
        %1522 = vmatprep.subr.mxu0 0.0
        %1523 = vmatpush1.msra.mxu0 0.0
        %1524 = vmatprep.subr.mxu0 0.0
        %1525 = vmatpush1.msra.mxu0 0.0
        %1526 = vmatprep.subr.mxu0 0.0
        %1527 = vmatpush1.msra.mxu0 0.0
        %1528 = vmatprep.subr.mxu0 0.0
        %1529 = vmatpush1.msra.mxu0 0.0
        %1530 = vmatprep.subr.mxu0 0.0
        %1531 = vmatpush1.msra.mxu0 0.0
        %1532 = vmatprep.subr.mxu0 0.0
        %1533 = vmatpush1.msra.mxu0 0.0
        %1534 = vmatprep.subr.mxu0 0.0
        %1535 = vmatpush1.msra.mxu0 0.0
        %1536 = vmatprep.subr.mxu0 0.0
        %1537 = vmatpush1.msra.mxu0 0.0
        %1538 = vmatprep.subr.mxu0 0.0
        %1539 = vmatpush1.msra.mxu0 0.0
        %1540 = vmatprep.subr.mxu0 0.0
        %1541 = vmatpush1.msra.mxu0 0.0
        %1542 = vmatprep.subr.mxu0 0.0
        %1543 = vmatpush1.msra.mxu0 0.0
        %1544 = vmatprep.subr.mxu0 0.0
        %1545 = vmatpush1.msra.mxu0 0.0
        %1546 = vmatprep.subr.mxu0 0.0
        %1547 = vmatpush1.msra.mxu0 0.0
        %1548 = vmatprep.subr.mxu0 0.0
        %1549 = vmatpush1.msra.mxu0 0.0
        %1550 = vmatprep.subr.mxu0 0.0
        %1551 = vmatpush1.msra.mxu0 0.0
        %1552 = vmatprep.subr.mxu0 0.0
        %1553 = vmatpush1.msra.mxu0 0.0
        %1554 = vmatprep.subr.mxu0 0.0
        %1555 = vmatpush1.msra.mxu0 0.0
        %1556 = vmatprep.subr.mxu0 0.0
        %1557 = vmatpush1.msra.mxu0 0.0
        %1558 = vmatprep.subr.mxu0 0.0
        %1559 = vmatpush1.msra.mxu0 0.0
        %1560 = vmatprep.mubr.f32.mxu0 0.0
        %1561 = vmatmul.mubr.f32.gmra.mrb[0].mxu0 %v1491
        %v1562 = vpop.f32.mrb[0].mxu0
        %v1563 = vadd.f32 0.0, %v1562
        %v1564 = vpop.f32.mrb[0].mxu0
        %1565 = vmatprep.mubr.f32.mxu0 0.0
        %1566 = vmatmul.mubr.f32.gmra.mrb[0].mxu0 %v1494
        %v1567 = vpop.f32.mrb[0].mxu0
        %v1568 = vadd.f32 0.0, %v1567
        %v1569 = vpop.f32.mrb[0].mxu0
        %1570 = vdwg.mxu0
        %v1572 = vsel %vm811, %v1073, 0
        %v1575 = vsel %vm811, %v1149, 0
        %1577 = vmatprep.subr.mxu0 0.0
        %1578 = vmatpush1.msra.mxu0 %v1152
        %1579 = vmatprep.subr.mxu0 0.0
        %1580 = vmatpush1.msra.mxu0 %v1153
        %1581 = vmatprep.subr.mxu0 0.0
        %1582 = vmatpush1.msra.mxu0 0.0
        %1583 = vmatprep.subr.mxu0 0.0
        %1584 = vmatpush1.msra.mxu0 0.0
        %1585 = vmatprep.subr.mxu0 0.0
        %1586 = vmatpush1.msra.mxu0 0.0
        %1587 = vmatprep.subr.mxu0 0.0
        %1588 = vmatpush1.msra.mxu0 0.0
        %1589 = vmatprep.subr.mxu0 0.0
        %1590 = vmatpush1.msra.mxu0 0.0
        %1591 = vmatprep.subr.mxu0 0.0
        %1592 = vmatpush1.msra.mxu0 0.0
        %1593 = vmatprep.subr.mxu0 0.0
        %1594 = vmatpush1.msra.mxu0 0.0
        %1595 = vmatprep.subr.mxu0 0.0
        %1596 = vmatpush1.msra.mxu0 0.0
        %1597 = vmatprep.subr.mxu0 0.0
        %1598 = vmatpush1.msra.mxu0 0.0
        %1599 = vmatprep.subr.mxu0 0.0
        %1600 = vmatpush1.msra.mxu0 0.0
        %1601 = vmatprep.subr.mxu0 0.0
        %1602 = vmatpush1.msra.mxu0 0.0
        %1603 = vmatprep.subr.mxu0 0.0
        %1604 = vmatpush1.msra.mxu0 0.0
        %1605 = vmatprep.subr.mxu0 0.0
        %1606 = vmatpush1.msra.mxu0 0.0
        %1607 = vmatprep.subr.mxu0 0.0
        %1608 = vmatpush1.msra.mxu0 0.0
        %1609 = vmatprep.subr.mxu0 0.0
        %1610 = vmatpush1.msra.mxu0 0.0
        %1611 = vmatprep.subr.mxu0 0.0
        %1612 = vmatpush1.msra.mxu0 0.0
        %1613 = vmatprep.subr.mxu0 0.0
        %1614 = vmatpush1.msra.mxu0 0.0
        %1615 = vmatprep.subr.mxu0 0.0
        %1616 = vmatpush1.msra.mxu0 0.0
        %1617 = vmatprep.subr.mxu0 0.0
        %1618 = vmatpush1.msra.mxu0 0.0
        %1619 = vmatprep.subr.mxu0 0.0
        %1620 = vmatpush1.msra.mxu0 0.0
        %1621 = vmatprep.subr.mxu0 0.0
        %1622 = vmatpush1.msra.mxu0 0.0
        %1623 = vmatprep.subr.mxu0 0.0
        %1624 = vmatpush1.msra.mxu0 0.0
        %1625 = vmatprep.subr.mxu0 0.0
        %1626 = vmatpush1.msra.mxu0 0.0
        %1627 = vmatprep.subr.mxu0 0.0
        %1628 = vmatpush1.msra.mxu0 0.0
        %1629 = vmatprep.subr.mxu0 0.0
        %1630 = vmatpush1.msra.mxu0 0.0
        %1631 = vmatprep.subr.mxu0 0.0
        %1632 = vmatpush1.msra.mxu0 0.0
        %1633 = vmatprep.subr.mxu0 0.0
        %1634 = vmatpush1.msra.mxu0 0.0
        %1635 = vmatprep.subr.mxu0 0.0
        %1636 = vmatpush1.msra.mxu0 0.0
        %1637 = vmatprep.subr.mxu0 0.0
        %1638 = vmatpush1.msra.mxu0 0.0
        %1639 = vmatprep.subr.mxu0 0.0
        %1640 = vmatpush1.msra.mxu0 0.0
        %1641 = vmatprep.mubr.f32.mxu0 0.0
        %1642 = vmatmul.mubr.f32.gmra.mrb[0].mxu0 %v1572
        %v1643 = vpop.f32.mrb[0].mxu0
        %v1644 = vadd.f32 %v1563, %v1643
        %v1645 = vpop.f32.mrb[0].mxu0
        %1646 = vmatprep.mubr.f32.mxu0 0.0
        %1647 = vmatmul.mubr.f32.gmra.mrb[0].mxu0 %v1575
        %v1648 = vpop.f32.mrb[0].mxu0
        %v1649 = vadd.f32 %v1568, %v1648
        %v1650 = vpop.f32.mrb[0].mxu0
        %1651 = vdwg.mxu0
        %v1652 = vld [vmem:[%s651] sm:$0x1]
        %v1654 = vlaneseq
        %v1655 = vshrl.u32 %v1654, 7
        %v1656 = vsub.s32 0, %v1655
        %v1657 = vrot.slane %v1652, %v1656
        %v1659 = vadd.f32 %v1644, %v1657
        %v1660 = vadd.f32 %v1649, %v1657
        %v1661 = vadd.f32 %v1659, %v689
        %v1662 = vadd.f32 %v1660, %v690
        %v1663 = vld [vmem:[%s654] sm:$0x1]
        %v1664 = vld [vmem:[%s657] sm:$0x1]
        %v1665 = vsel %vm702, %v1661, 0.0
        %1666 = vadd.xlane.f32.xlu0 %v1665
        %v1667 = vpop.xlane.xlu0 %1666
        %v1668 = vsel %vm702, %v1662, 0.0
        %1669 = vadd.xlane.f32.xlu0 %v1668
        %v1670 = vpop.xlane.xlu0 %1669
        %v1671 = vrcp.pop 32.0
        %v1672 = vmul.f32 %v1667, %v1671
        %v1673 = vmul.f32 %v1670, %v1671
        %v1674 = vsub.f32 %v1661, %v1672
        %v1675 = vsub.f32 %v1662, %v1673
        %v1676 = vmul.f32 %v1674, %v1674
        %v1677 = vmul.f32 %v1675, %v1675
        %v1678 = vsel %vm702, %v1676, 0.0
        %1679 = vadd.xlane.f32.xlu0 %v1678
        %v1680 = vpop.xlane.xlu0 %1679
        %v1681 = vsel %vm702, %v1677, 0.0
        %1682 = vadd.xlane.f32.xlu0 %v1681
        %v1683 = vpop.xlane.xlu0 %1682
        %v1684 = vmul.f32 %v1680, %v1671
        %v1685 = vmul.f32 %v1683, %v1671
        %v1686 = vadd.f32 %v1684, 1e-12
        %v1687 = vadd.f32 %v1685, 1e-12
        %v1688 = vrsqrt.pop %v1686
        %v1689 = vrsqrt.pop %v1687
        %v1690 = vmul.f32 %v1674, %v1688
        %v1691 = vmul.f32 %v1675, %v1689
        %v1693 = vlaneseq
        %v1694 = vshrl.u32 %v1693, 7
        %v1695 = vsub.s32 0, %v1694
        %v1696 = vrot.slane %v1663, %v1695
        %v1698 = vmul.f32 %v1690, %v1696
        %v1699 = vmul.f32 %v1691, %v1696
        %v1701 = vlaneseq
        %v1702 = vshrl.u32 %v1701, 7
        %v1703 = vsub.s32 0, %v1702
        %v1704 = vrot.slane %v1664, %v1703
        %v1706 = vadd.f32 %v1698, %v1704
        %v1707 = vadd.f32 %v1699, %v1704
        %v1708 = vld [vmem:[%s662] sm:$0xff]
        %v1709 = vld [vmem:[%s662 + $0x8] sm:$0xff]
        %v1710 = vld [vmem:[%s662 + $0x10] sm:$0xff]
        %v1711 = vld [vmem:[%s662 + $0x18] sm:$0xff]
        %v1712 = vld [vmem:[%s665] sm:$0x1]
        %v1714 = vlaneseq
        %v1715 = vshrl.u32 %v1714, 7
        %v1716 = vsub.s32 0, %v1715
        %v1717 = vrot.slane %v1712, %v1716
        %v1720 = vsel %vm702, %v1706, 0
        %v1723 = vsel %vm702, %v1707, 0
        %1725 = vmatprep.subr.mxu0 0.0
        %1726 = vmatpush1.msra.mxu0 %v1708
        %1727 = vmatprep.subr.mxu0 0.0
        %1728 = vmatpush1.msra.mxu0 %v1709
        %1729 = vmatprep.subr.mxu0 0.0
        %1730 = vmatpush1.msra.mxu0 %v1710
        %1731 = vmatprep.subr.mxu0 0.0
        %1732 = vmatpush1.msra.mxu0 %v1711
        %1733 = vmatprep.subr.mxu0 0.0
        %1734 = vmatpush1.msra.mxu0 0.0
        %1735 = vmatprep.subr.mxu0 0.0
        %1736 = vmatpush1.msra.mxu0 0.0
        %1737 = vmatprep.subr.mxu0 0.0
        %1738 = vmatpush1.msra.mxu0 0.0
        %1739 = vmatprep.subr.mxu0 0.0
        %1740 = vmatpush1.msra.mxu0 0.0
        %1741 = vmatprep.subr.mxu0 0.0
        %1742 = vmatpush1.msra.mxu0 0.0
        %1743 = vmatprep.subr.mxu0 0.0
        %1744 = vmatpush1.msra.mxu0 0.0
        %1745 = vmatprep.subr.mxu0 0.0
        %1746 = vmatpush1.msra.mxu0 0.0
        %1747 = vmatprep.subr.mxu0 0.0
        %1748 = vmatpush1.msra.mxu0 0.0
        %1749 = vmatprep.subr.mxu0 0.0
        %1750 = vmatpush1.msra.mxu0 0.0
        %1751 = vmatprep.subr.mxu0 0.0
        %1752 = vmatpush1.msra.mxu0 0.0
        %1753 = vmatprep.subr.mxu0 0.0
        %1754 = vmatpush1.msra.mxu0 0.0
        %1755 = vmatprep.subr.mxu0 0.0
        %1756 = vmatpush1.msra.mxu0 0.0
        %1757 = vmatprep.subr.mxu0 0.0
        %1758 = vmatpush1.msra.mxu0 0.0
        %1759 = vmatprep.subr.mxu0 0.0
        %1760 = vmatpush1.msra.mxu0 0.0
        %1761 = vmatprep.subr.mxu0 0.0
        %1762 = vmatpush1.msra.mxu0 0.0
        %1763 = vmatprep.subr.mxu0 0.0
        %1764 = vmatpush1.msra.mxu0 0.0
        %1765 = vmatprep.subr.mxu0 0.0
        %1766 = vmatpush1.msra.mxu0 0.0
        %1767 = vmatprep.subr.mxu0 0.0
        %1768 = vmatpush1.msra.mxu0 0.0
        %1769 = vmatprep.subr.mxu0 0.0
        %1770 = vmatpush1.msra.mxu0 0.0
        %1771 = vmatprep.subr.mxu0 0.0
        %1772 = vmatpush1.msra.mxu0 0.0
        %1773 = vmatprep.subr.mxu0 0.0
        %1774 = vmatpush1.msra.mxu0 0.0
        %1775 = vmatprep.subr.mxu0 0.0
        %1776 = vmatpush1.msra.mxu0 0.0
        %1777 = vmatprep.subr.mxu0 0.0
        %1778 = vmatpush1.msra.mxu0 0.0
        %1779 = vmatprep.subr.mxu0 0.0
        %1780 = vmatpush1.msra.mxu0 0.0
        %1781 = vmatprep.subr.mxu0 0.0
        %1782 = vmatpush1.msra.mxu0 0.0
        %1783 = vmatprep.subr.mxu0 0.0
        %1784 = vmatpush1.msra.mxu0 0.0
        %1785 = vmatprep.subr.mxu0 0.0
        %1786 = vmatpush1.msra.mxu0 0.0
        %1787 = vmatprep.subr.mxu0 0.0
        %1788 = vmatpush1.msra.mxu0 0.0
        %1789 = vmatprep.mubr.f32.mxu0 0.0
        %1790 = vmatmul.mubr.f32.gmra.mrb[0].mxu0 %v1720
        %v1791 = vpop.f32.mrb[0].mxu0
        %v1792 = vadd.f32 %v1717, %v1791
        %v1793 = vpop.f32.mrb[0].mxu0
        %1794 = vmatprep.mubr.f32.mxu0 0.0
        %1795 = vmatmul.mubr.f32.gmra.mrb[0].mxu0 %v1723
        %v1796 = vpop.f32.mrb[0].mxu0
        %v1797 = vadd.f32 %v1717, %v1796
        %v1798 = vpop.f32.mrb[0].mxu0
        %1799 = vdwg.mxu0
        %v1800 = vmul.f32 %v1792, %v1792
        %v1801 = vmul.f32 %v1797, %v1797
        %v1802 = vmul.f32 %v1792, %v1800
        %v1803 = vmul.f32 %v1797, %v1801
        %v1804 = vmul.f32 %v1802, 0.044715
        %v1805 = vmul.f32 %v1803, 0.044715
        %v1806 = vadd.f32 %v1792, %v1804
        %v1807 = vadd.f32 %v1797, %v1805
        %v1808 = vmul.f32 %v1806, 0.7978846
        %v1809 = vmul.f32 %v1807, 0.7978846
        %v1810 = vtanh.pop %v1808
        %v1811 = vtanh.pop %v1809
        %v1812 = vadd.f32 %v1810, 1.0
        %v1813 = vadd.f32 %v1811, 1.0
        %v1814 = vmul.f32 %v1812, 0.5
        %v1815 = vmul.f32 %v1813, 0.5
        %v1816 = vmul.f32 %v1792, %v1814
        %v1817 = vmul.f32 %v1797, %v1815
        %v1818 = vld [vmem:[%s670] sm:$0xff]
        %v1819 = vld [vmem:[%s670 + $0x8] sm:$0xff]
        %v1820 = vld [vmem:[%s670 + $0x10] sm:$0xff]
        %v1821 = vld [vmem:[%s670 + $0x18] sm:$0xff]
        %v1822 = vld [vmem:[%s670 + $0x20] sm:$0xff]
        %v1823 = vld [vmem:[%s670 + $0x28] sm:$0xff]
        %v1824 = vld [vmem:[%s670 + $0x30] sm:$0xff]
        %v1825 = vld [vmem:[%s670 + $0x38] sm:$0xff]
        %v1826 = vld [vmem:[%s673] sm:$0x1]
        %v1828 = vlaneseq
        %v1829 = vshrl.u32 %v1828, 7
        %v1830 = vsub.s32 0, %v1829
        %v1831 = vrot.slane %v1826, %v1830
        %vm1833 = vcmask 523264
        %v1835 = vsel %vm1833, %v1816, 0
        %v1838 = vsel %vm1833, %v1817, 0
        %1840 = vmatprep.subr.mxu0 0.0
        %1841 = vmatpush1.msra.mxu0 %v1818
        %1842 = vmatprep.subr.mxu0 0.0
        %1843 = vmatpush1.msra.mxu0 %v1819
        %1844 = vmatprep.subr.mxu0 0.0
        %1845 = vmatpush1.msra.mxu0 %v1820
        %1846 = vmatprep.subr.mxu0 0.0
        %1847 = vmatpush1.msra.mxu0 %v1821
        %1848 = vmatprep.subr.mxu0 0.0
        %1849 = vmatpush1.msra.mxu0 %v1822
        %1850 = vmatprep.subr.mxu0 0.0
        %1851 = vmatpush1.msra.mxu0 %v1823
        %1852 = vmatprep.subr.mxu0 0.0
        %1853 = vmatpush1.msra.mxu0 %v1824
        %1854 = vmatprep.subr.mxu0 0.0
        %1855 = vmatpush1.msra.mxu0 %v1825
        %1856 = vmatprep.subr.mxu0 0.0
        %1857 = vmatpush1.msra.mxu0 0.0
        %1858 = vmatprep.subr.mxu0 0.0
        %1859 = vmatpush1.msra.mxu0 0.0
        %1860 = vmatprep.subr.mxu0 0.0
        %1861 = vmatpush1.msra.mxu0 0.0
        %1862 = vmatprep.subr.mxu0 0.0
        %1863 = vmatpush1.msra.mxu0 0.0
        %1864 = vmatprep.subr.mxu0 0.0
        %1865 = vmatpush1.msra.mxu0 0.0
        %1866 = vmatprep.subr.mxu0 0.0
        %1867 = vmatpush1.msra.mxu0 0.0
        %1868 = vmatprep.subr.mxu0 0.0
        %1869 = vmatpush1.msra.mxu0 0.0
        %1870 = vmatprep.subr.mxu0 0.0
        %1871 = vmatpush1.msra.mxu0 0.0
        %1872 = vmatprep.subr.mxu0 0.0
        %1873 = vmatpush1.msra.mxu0 0.0
        %1874 = vmatprep.subr.mxu0 0.0
        %1875 = vmatpush1.msra.mxu0 0.0
        %1876 = vmatprep.subr.mxu0 0.0
        %1877 = vmatpush1.msra.mxu0 0.0
        %1878 = vmatprep.subr.mxu0 0.0
        %1879 = vmatpush1.msra.mxu0 0.0
        %1880 = vmatprep.subr.mxu0 0.0
        %1881 = vmatpush1.msra.mxu0 0.0
        %1882 = vmatprep.subr.mxu0 0.0
        %1883 = vmatpush1.msra.mxu0 0.0
        %1884 = vmatprep.subr.mxu0 0.0
        %1885 = vmatpush1.msra.mxu0 0.0
        %1886 = vmatprep.subr.mxu0 0.0
        %1887 = vmatpush1.msra.mxu0 0.0
        %1888 = vmatprep.subr.mxu0 0.0
        %1889 = vmatpush1.msra.mxu0 0.0
        %1890 = vmatprep.subr.mxu0 0.0
        %1891 = vmatpush1.msra.mxu0 0.0
        %1892 = vmatprep.subr.mxu0 0.0
        %1893 = vmatpush1.msra.mxu0 0.0
        %1894 = vmatprep.subr.mxu0 0.0
        %1895 = vmatpush1.msra.mxu0 0.0
        %1896 = vmatprep.subr.mxu0 0.0
        %1897 = vmatpush1.msra.mxu0 0.0
        %1898 = vmatprep.subr.mxu0 0.0
        %1899 = vmatpush1.msra.mxu0 0.0
        %1900 = vmatprep.subr.mxu0 0.0
        %1901 = vmatpush1.msra.mxu0 0.0
        %1902 = vmatprep.subr.mxu0 0.0
        %1903 = vmatpush1.msra.mxu0 0.0
        %1904 = vmatprep.mubr.f32.mxu0 0.0
        %1905 = vmatmul.mubr.f32.gmra.mrb[0].mxu0 %v1835
        %v1906 = vpop.f32.mrb[0].mxu0
        %v1907 = vadd.f32 %v1831, %v1906
        %v1908 = vpop.f32.mrb[0].mxu0
        %1909 = vmatprep.mubr.f32.mxu0 0.0
        %1910 = vmatmul.mubr.f32.gmra.mrb[0].mxu0 %v1838
        %v1911 = vpop.f32.mrb[0].mxu0
        %v1912 = vadd.f32 %v1831, %v1911
        %v1913 = vpop.f32.mrb[0].mxu0
        %1914 = vdwg.mxu0
        %v1915 = vadd.f32 %v1907, %v1706
        %v1916 = vadd.f32 %v1912, %v1707
        %v1917 = vld [vmem:[%s676] sm:$0x1]
        %v1918 = vld [vmem:[%s679] sm:$0x1]
        %v1919 = vsel %vm702, %v1915, 0.0
        %1920 = vadd.xlane.f32.xlu0 %v1919
        %v1921 = vpop.xlane.xlu0 %1920
        %v1922 = vsel %vm702, %v1916, 0.0
        %1923 = vadd.xlane.f32.xlu0 %v1922
        %v1924 = vpop.xlane.xlu0 %1923
        %v1925 = vmul.f32 %v1921, %v1671
        %v1926 = vmul.f32 %v1924, %v1671
        %v1927 = vsub.f32 %v1915, %v1925
        %v1928 = vsub.f32 %v1916, %v1926
        %v1929 = vmul.f32 %v1927, %v1927
        %v1930 = vmul.f32 %v1928, %v1928
        %v1931 = vsel %vm702, %v1929, 0.0
        %1932 = vadd.xlane.f32.xlu0 %v1931
        %v1933 = vpop.xlane.xlu0 %1932
        %v1934 = vsel %vm702, %v1930, 0.0
        %1935 = vadd.xlane.f32.xlu0 %v1934
        %v1936 = vpop.xlane.xlu0 %1935
        %v1937 = vmul.f32 %v1933, %v1671
        %v1938 = vmul.f32 %v1936, %v1671
        %v1939 = vadd.f32 %v1937, 1e-12
        %v1940 = vadd.f32 %v1938, 1e-12
        %v1941 = vrsqrt.pop %v1939
        %v1942 = vrsqrt.pop %v1940
        %v1943 = vmul.f32 %v1927, %v1941
        %v1944 = vmul.f32 %v1928, %v1942
        %v1946 = vlaneseq
        %v1947 = vshrl.u32 %v1946, 7
        %v1948 = vsub.s32 0, %v1947
        %v1949 = vrot.slane %v1917, %v1948
        %v1951 = vmul.f32 %v1943, %v1949
        %v1952 = vmul.f32 %v1944, %v1949
        %v1954 = vlaneseq
        %v1955 = vshrl.u32 %v1954, 7
        %v1956 = vsub.s32 0, %v1955
        %v1957 = vrot.slane %v1918, %v1956
        %v1959 = vadd.f32 %v1951, %v1957
        %v1960 = vadd.f32 %v1952, %v1957
        %1961 = vst.msk [vmem:[#allocation2] sm:$0xff] %vm702, %v1959
        %1962 = vst.msk [vmem:[#allocation2 + $0x8] sm:$0xff] %vm702, %v1960
        %p1963 = scmp.eq.s32.totalorder %s28, 1
        // Predicated region
        $region89: #{xlnet_multilabel_forward.1} parent=83 // pred_check
          %p1964 = pneg %p1963
        $region90: #{xlnet_multilabel_forward.1} parent=83 // pred_check_branch
          %1966 = sbr.rel (%p1964) target = $region92
        $region91: #{xlnet_multilabel_forward.1} parent=83 // pred_region
          %v1967 = vsel %vm702, %v1959, 0.0
          %v1968 = vrot.slane %v1967, 4
          %v1969 = vadd.f32 %v1967, %v1968
          %v1970 = vrot.slane %v1969, 2
          %v1971 = vadd.f32 %v1969, %v1970
          %v1972 = vrot.slane %v1971, 1
          %v1973 = vadd.f32 %v1971, %v1972
          %v1974 = vsel %vm702, %v1960, 0.0
          %v1975 = vrot.slane %v1974, 4
          %v1976 = vadd.f32 %v1974, %v1975
          %v1977 = vrot.slane %v1976, 2
          %v1978 = vadd.f32 %v1976, %v1977
          %v1979 = vrot.slane %v1978, 1
          %v1980 = vadd.f32 %v1978, %v1979
          %v1981 = vrcp.pop 8.0
          %v1982 = vmul.f32 %v1973, %v1981
          %v1983 = vmul.f32 %v1980, %v1981
          %v1984 = vld [vmem:[%s14] sm:$0xff]
          %v1985 = vld [vmem:[%s14 + $0x8] sm:$0xff]
          %v1986 = vld [vmem:[%s14 + $0x10] sm:$0xff]
          %v1987 = vld [vmem:[%s14 + $0x18] sm:$0xff]
          %v1988 = vld [vmem:[%s15] sm:$0x1]
          %v1990 = vlaneseq
          %v1991 = vshrl.u32 %v1990, 7
          %v1992 = vsub.s32 0, %v1991
          %v1993 = vrot.slane %v1988, %v1992
          %vm1997 = vcmask 1041409
          %v1998 = vsel %vm1997, %v1983, %v1982
          %v1999 = vsel %vm702, %v1998, 0
          %2001 = vmatprep.subr.mxu0 0.0
          %2002 = vmatpush1.msra.mxu0 %v1984
          %2003 = vmatprep.subr.mxu0 0.0
          %2004 = vmatpush1.msra.mxu0 %v1985
          %2005 = vmatprep.subr.mxu0 0.0
          %2006 = vmatpush1.msra.mxu0 %v1986
          %2007 = vmatprep.subr.mxu0 0.0
          %2008 = vmatpush1.msra.mxu0 %v1987
          %2009 = vmatprep.subr.mxu0 0.0
          %2010 = vmatpush1.msra.mxu0 0.0
          %2011 = vmatprep.subr.mxu0 0.0
          %2012 = vmatpush1.msra.mxu0 0.0
          %2013 = vmatprep.subr.mxu0 0.0
          %2014 = vmatpush1.msra.mxu0 0.0
          %2015 = vmatprep.subr.mxu0 0.0
          %2016 = vmatpush1.msra.mxu0 0.0
          %2017 = vmatprep.subr.mxu0 0.0
          %2018 = vmatpush1.msra.mxu0 0.0
          %2019 = vmatprep.subr.mxu0 0.0
          %2020 = vmatpush1.msra.mxu0 0.0
          %2021 = vmatprep.subr.mxu0 0.0
          %2022 = vmatpush1.msra.mxu0 0.0
          %2023 = vmatprep.subr.mxu0 0.0
          %2024 = vmatpush1.msra.mxu0 0.0
          %2025 = vmatprep.subr.mxu0 0.0
          %2026 = vmatpush1.msra.mxu0 0.0
          %2027 = vmatprep.subr.mxu0 0.0
          %2028 = vmatpush1.msra.mxu0 0.0
          %2029 = vmatprep.subr.mxu0 0.0
          %2030 = vmatpush1.msra.mxu0 0.0
          %2031 = vmatprep.subr.mxu0 0.0
          %2032 = vmatpush1.msra.mxu0 0.0
          %2033 = vmatprep.subr.mxu0 0.0
          %2034 = vmatpush1.msra.mxu0 0.0
          %2035 = vmatprep.subr.mxu0 0.0
          %2036 = vmatpush1.msra.mxu0 0.0
          %2037 = vmatprep.subr.mxu0 0.0
          %2038 = vmatpush1.msra.mxu0 0.0
          %2039 = vmatprep.subr.mxu0 0.0
          %2040 = vmatpush1.msra.mxu0 0.0
          %2041 = vmatprep.subr.mxu0 0.0
          %2042 = vmatpush1.msra.mxu0 0.0
          %2043 = vmatprep.subr.mxu0 0.0
          %2044 = vmatpush1.msra.mxu0 0.0
          %2045 = vmatprep.subr.mxu0 0.0
          %2046 = vmatpush1.msra.mxu0 0.0
          %2047 = vmatprep.subr.mxu0 0.0
          %2048 = vmatpush1.msra.mxu0 0.0
          %2049 = vmatprep.subr.mxu0 0.0
          %2050 = vmatpush1.msra.mxu0 0.0
          %2051 = vmatprep.subr.mxu0 0.0
          %2052 = vmatpush1.msra.mxu0 0.0
          %2053 = vmatprep.subr.mxu0 0.0
          %2054 = vmatpush1.msra.mxu0 0.0
          %2055 = vmatprep.subr.mxu0 0.0
          %2056 = vmatpush1.msra.mxu0 0.0
          %2057 = vmatprep.subr.mxu0 0.0
          %2058 = vmatpush1.msra.mxu0 0.0
          %2059 = vmatprep.subr.mxu0 0.0
          %2060 = vmatpush1.msra.mxu0 0.0
          %2061 = vmatprep.subr.mxu0 0.0
          %2062 = vmatpush1.msra.mxu0 0.0
          %2063 = vmatprep.subr.mxu0 0.0
          %2064 = vmatpush1.msra.mxu0 0.0
          %2065 = vmatprep.mubr.f32.mxu0 0.0
          %2066 = vmatmul.mubr.f32.gmra.mrb[0].mxu0 %v1999
          %v2067 = vpop.f32.mrb[0].mxu0
          %v2068 = vadd.f32 %v1993, %v2067
          %v2069 = vpop.f32.mrb[0].mxu0
          %2070 = vdwg.mxu0
          %2071 = vst [vmem:[#allocation3] sm:$0x3] %v2068
        $region92: #{xlnet_multilabel_forward.1} parent=83 // pred_fallthru
          _
        // Predicated region
        $region93: #{xlnet_multilabel_forward.1} parent=83 // pred_check
          %p2072 = pneg %p437
        $region94: #{xlnet_multilabel_forward.1} parent=83 // pred_check_branch
          %2074 = sbr.rel (%p2072) target = $region96
        $region95: #{xlnet_multilabel_forward.1} parent=83 // pred_region
          %s2076 = ssub.s32 32, 32
          %2077 = vsyncadd [#allocation4], %s2076
          %s2079 = sshll.u32 [#allocation3], 4
          %s2080 = int_to_ptr.vmem [resolvable:$true] %s2079
          %2082 = dma.vmem_to_hbm [thread:$0]  %s2080, 32, %s16, [#allocation4]
        $region96: #{xlnet_multilabel_forward.1} parent=83 // pred_fallthru
          _
        // Predicated region
        $region97: #{xlnet_multilabel_forward.1} parent=83 // pred_check
          %p2083 = pneg %p437
        $region98: #{xlnet_multilabel_forward.1} parent=83 // pred_check_branch
          %2085 = sbr.rel (%p2083) target = $region100
        $region99: #{xlnet_multilabel_forward.1} parent=83 // pred_region
          %2086 = dma.done [#allocation4], 32
        $region100: #{xlnet_multilabel_forward.1} parent=83 // pred_fallthru
          _
      $region84: #{xlnet_multilabel_forward.1} parent=5 // pred_fallthru
        _
      %p2087 = scmp.le.s32.totalorder 2, %s23
      // Predicated region
      $region101: #{xlnet_multilabel_forward.1} parent=5 // pred_check
        %p2088 = pneg %p2087
      $region102: #{xlnet_multilabel_forward.1} parent=5 // pred_check_branch
        %2090 = sbr.rel (%p2088) target = $region104
      $region103: #{xlnet_multilabel_forward.1} parent=5 // pred_region
        %s2091 = ssub.s32 %s23, 2
      $region104: #{xlnet_multilabel_forward.1} parent=5 // pred_fallthru
        _
    $region6: #{xlnet_multilabel_forward.1} parent=1 // loop_footer
      %s27 = sadd.s32 1, %s23
    $region7: #{xlnet_multilabel_forward.1} parent=1 // loop_footer_branch
      %22 = sbr.rel target = $region3
    $region8: #{xlnet_multilabel_forward.1} parent=1 // loop_exit
      _
    %2092 = vsyncpa [#allocation4], 1
    %s2093 = scalar_lea.sflag [#allocation4], 1
    %2094 = vsyncpa %s2093, 1

</llo_original>
